<compile_context>
chip_gen: v7x
topology: tpu7x:2x2x1
jax: 0.10.0
libtpu: 0.0.40
codegen_flags: <defaults>
</compile_context>

<pallas_src>
import jax
import jax.numpy as jnp
from jax.experimental import pallas as pl
from jax.experimental.pallas import tpu as pltpu

_LANE = 128


def _round_up(v, m):
    return ((v + m - 1) // m) * m


def _pad2d(a, rows, cols):
    r, c = a.shape
    return jnp.pad(a, ((0, rows - r), (0, cols - c)))


def _make_fused_sage_kernel(relu_flags):
    """Kernel computing every SAGE layer in one invocation.

    relu_flags[l] == True  -> layer l is a hidden layer (BN already folded into
    its weights/bias in the wrapper), apply relu epilogue.
    Per-layer param refs (in order): W_l (bf16), W_r (bf16), b (f32).
    """
    n_layers = len(relu_flags)

    def kernel(adj_ref, dinv_ref, x_ref, *refs):
        o_ref = refs[-1]
        p_refs = refs[:-1]

        adj = adj_ref[...]        # (N, N) bf16 raw 0/1 adjacency
        dinv = dinv_ref[...]      # (N, 1) f32, 1/deg (0 for isolated nodes)
        h = x_ref[...]            # (N, 128) bf16 lane-dense activations

        for layer in range(n_layers):
            wl_ref = p_refs[3 * layer]
            wr_ref = p_refs[3 * layer + 1]
            b_ref = p_refs[3 * layer + 2]

            h16 = h.astype(jnp.bfloat16)
            # Mean aggregation: per-row scale of the f32-accumulated matmul.
            agg = jnp.dot(adj, h16, preferred_element_type=jnp.float32) * dinv
            # Two accumulating MXU matmuls (no concat copy); f32 epilogue.
            h = (jnp.dot(agg.astype(jnp.bfloat16), wl_ref[...],
                         preferred_element_type=jnp.float32)
                 + jnp.dot(h16, wr_ref[...],
                           preferred_element_type=jnp.float32)
                 + b_ref[...])
            if relu_flags[layer]:
                # BN(eval) already folded into wl/wr/b; only relu remains (VPU).
                h = jnp.maximum(h, 0.0)
            # TODO(synk): F.dropout omitted — eval mode (training=False) makes
            # it the identity.

        o_ref[...] = h

    return kernel


def sage_forward(x, adj, params):
    """Full SAGE forward in one fused pallas_call (all tensors resident in VMEM)."""
    N, f_in = x.shape
    assert adj.shape == (N, N)
    assert N % 16 == 0, "node count must be a multiple of 16 (bf16 sublane tiling)"

    # Degree for mean aggregation; normalisation applied inside the kernel.
    deg = jnp.sum(adj, axis=1, keepdims=True)
    deg_inv = jnp.where(deg > 0.0, 1.0 / jnp.where(deg > 0.0, deg, 1.0), 0.0)
    deg_inv = deg_inv.astype(jnp.float32)                      # (N, 1)

    f_in_pad = _round_up(f_in, _LANE)
    x_pad = _pad2d(x, N, f_in_pad).astype(jnp.bfloat16)        # lane-dense bf16
    adj16 = adj.astype(jnp.bfloat16)                           # 0/1 exact in bf16

    num_layers = len(params)
    relu_flags = []
    args = [adj16, deg_inv, x_pad]
    in_specs = [
        pl.BlockSpec((N, N), lambda i: (0, 0)),
        pl.BlockSpec((N, 1), lambda i: (0, 0)),
        pl.BlockSpec((N, f_in_pad), lambda i: (0, 0)),
    ]

    flops = 0
    bytes_accessed = adj16.size * 2 + deg_inv.size * 4 + x_pad.size * 2

    cur = f_in_pad
    for layer, p in enumerate(params):
        _, fo = p["w_l"].shape
        last = layer == num_layers - 1
        # Lane-dense (>=128) output width for EVERY layer, including the last
        # (unmasked stores, full MXU output width); wrapper slices at the end.
        fo_pad = _round_up(fo, _LANE)

        wl, wr, b = p["w_l"], p["w_r"], p["b"]
        if not last:
            # Fold BatchNorm1d (eval) into weights/bias:
            #   (z) * s + t == z @ diag(s) shifted  ->  W*s, b*s + t.
            # Zero-padding of extra columns is preserved (s,t padded with 0).
            s, t = p["scale"], p["shift"]
            wl = wl * s
            wr = wr * s
            b = b * s + t
        wl = _pad2d(wl, cur, fo_pad).astype(jnp.bfloat16)
        wr = _pad2d(wr, cur, fo_pad).astype(jnp.bfloat16)
        b = _pad2d(b, 1, fo_pad).astype(jnp.float32)

        args += [wl, wr, b]
        in_specs += [pl.BlockSpec((cur, fo_pad), lambda i: (0, 0)),
                     pl.BlockSpec((cur, fo_pad), lambda i: (0, 0)),
                     pl.BlockSpec((1, fo_pad), lambda i: (0, 0))]
        relu_flags.append(not last)

        flops += 2 * N * N * cur + 4 * N * cur * fo_pad
        bytes_accessed += wl.size * 2 + wr.size * 2 + b.size * 4
        cur = fo_pad

    bytes_accessed += N * cur * 4  # f32 output
    kernel = _make_fused_sage_kernel(tuple(relu_flags))

    out = pl.pallas_call(
        kernel,
        out_shape=jax.ShapeDtypeStruct((N, cur), jnp.float32),
        grid_spec=pltpu.PrefetchScalarGridSpec(
            num_scalar_prefetch=0,
            grid=(1,),
            in_specs=in_specs,
            out_specs=pl.BlockSpec((N, cur), lambda i: (0, 0)),
        ),
        compiler_params=pltpu.CompilerParams(
            dimension_semantics=("arbitrary",)),
        cost_estimate=pl.CostEstimate(
            flops=int(flops),
            transcendentals=0,
            bytes_accessed=int(bytes_accessed)),
    )(*args)

    f_out = params[-1]["w_l"].shape[1]
    return out[:, :f_out]


def init_sage_params(key, in_channels, hidden_channels, out_channels,
                     num_layers):
    """Deterministic synthetic parameters matching SAGE.__init__ shapes."""
    dims = ([in_channels] + [hidden_channels] * (num_layers - 1)
            + [out_channels])
    params = []
    for layer in range(num_layers):
        f_in, f_out = dims[layer], dims[layer + 1]
        key, k1, k2, k3, k4, k5 = jax.random.split(key, 6)
        p = dict(
            w_l=jax.random.normal(k1, (f_in, f_out), jnp.float32) * 0.1,
            w_r=jax.random.normal(k2, (f_in, f_out), jnp.float32) * 0.1,
            b=jax.random.normal(k3, (1, f_out), jnp.float32) * 0.01,
        )
        if layer < num_layers - 1:
            # BatchNorm1d (eval): gamma/beta random, running stats = (0, 1)
            gamma = 1.0 + 0.1 * jax.random.normal(k4, (1, f_out), jnp.float32)
            beta = 0.1 * jax.random.normal(k5, (1, f_out), jnp.float32)
            eps = 1e-5
            run_mean = jnp.zeros((1, f_out), jnp.float32)
            run_var = jnp.ones((1, f_out), jnp.float32)
            scale = gamma / jnp.sqrt(run_var + eps)
            p["scale"] = scale
            p["shift"] = beta - run_mean * scale
        params.append(p)
    return params


def sage_reference(x, adj, params):
    """Pure-JAX f32 reference (same math, unfused / unpadded / unfolded BN)."""
    deg = jnp.sum(adj, axis=1, keepdims=True)
    inv = jnp.where(deg > 0, 1.0 / jnp.where(deg > 0, deg, 1.0), 0.0)
    adj_norm = adj * inv
    h = x
    n = len(params)
    for i, p in enumerate(params):
        agg = adj_norm @ h
        h = agg @ p["w_l"] + h @ p["w_r"] + p["b"]
        if i < n - 1:
            h = jnp.maximum(h * p["scale"] + p["shift"], 0.0)
    return h


if __name__ == "__main__":
    N = 128                 # number of nodes
    in_channels = 32
    hidden_channels = 64
    out_channels = 16
    num_layers = 3
    dropout = 0.5           # unused at eval time (identity)

    key = jax.random.PRNGKey(0)
    kx, kadj, kp = jax.random.split(key, 3)

    x = jax.random.normal(kx, (N, in_channels), jnp.float32)
    # random sparse-ish symmetric adjacency as a dense float matrix
    adj = (jax.random.uniform(kadj, (N, N)) < 0.05).astype(jnp.float32)
    adj = jnp.maximum(adj, adj.T)

    params = init_sage_params(kp, in_channels, hidden_channels,
                              out_channels, num_layers)

    out = jax.jit(sage_forward)(x, adj, params)
    out = jax.block_until_ready(out)

    assert out.shape == (N, out_channels) and out.dtype == jnp.float32
    assert bool(jnp.all(jnp.isfinite(out)))

    ref = sage_reference(x, adj, params)
    rel_err = float(jnp.max(jnp.abs(out - ref) / (jnp.abs(ref) + 1.0)))
    assert rel_err < 5e-2, f"mismatch vs reference: rel_err={rel_err}"
    print("KERNEL_OK")
</pallas_src>

<mosaic_0001>
module attributes {stable_mosaic.version = 11 : i64} {
  func.func @kernel(%arg0: i32, %arg1: memref<128x128xbf16, #tpu.memory_space<vmem>>, %arg2: memref<128x1xf32, #tpu.memory_space<vmem>>, %arg3: memref<128x128xbf16, #tpu.memory_space<vmem>>, %arg4: memref<128x128xbf16, #tpu.memory_space<vmem>>, %arg5: memref<128x128xbf16, #tpu.memory_space<vmem>>, %arg6: memref<1x128xf32, #tpu.memory_space<vmem>>, %arg7: memref<128x128xbf16, #tpu.memory_space<vmem>>, %arg8: memref<128x128xbf16, #tpu.memory_space<vmem>>, %arg9: memref<1x128xf32, #tpu.memory_space<vmem>>, %arg10: memref<128x128xbf16, #tpu.memory_space<vmem>>, %arg11: memref<128x128xbf16, #tpu.memory_space<vmem>>, %arg12: memref<1x128xf32, #tpu.memory_space<vmem>>, %arg13: memref<128x128xf32, #tpu.memory_space<vmem>>) attributes {dimension_semantics = [#tpu.dimension_semantics<arbitrary>], iteration_bounds = array<i64: 1>, scalar_prefetch = 0 : i64, scratch_operands = 0 : i64, tpu.core_type = #tpu.core_type<tc>, window_params = [{pipeline_mode = #tpu.pipeline_mode<synchronous>, transform_indices = @transform_0, window_bounds = array<i64: 128, 128>}, {pipeline_mode = #tpu.pipeline_mode<synchronous>, transform_indices = @transform_1, window_bounds = array<i64: 128, 1>}, {pipeline_mode = #tpu.pipeline_mode<synchronous>, transform_indices = @transform_2, window_bounds = array<i64: 128, 128>}, {pipeline_mode = #tpu.pipeline_mode<synchronous>, transform_indices = @transform_3, window_bounds = array<i64: 128, 128>}, {pipeline_mode = #tpu.pipeline_mode<synchronous>, transform_indices = @transform_4, window_bounds = array<i64: 128, 128>}, {pipeline_mode = #tpu.pipeline_mode<synchronous>, transform_indices = @transform_5, window_bounds = array<i64: 1, 128>}, {pipeline_mode = #tpu.pipeline_mode<synchronous>, transform_indices = @transform_6, window_bounds = array<i64: 128, 128>}, {pipeline_mode = #tpu.pipeline_mode<synchronous>, transform_indices = @transform_7, window_bounds = array<i64: 128, 128>}, {pipeline_mode = #tpu.pipeline_mode<synchronous>, transform_indices = @transform_8, window_bounds = array<i64: 1, 128>}, {pipeline_mode = #tpu.pipeline_mode<synchronous>, transform_indices = @transform_9, window_bounds = array<i64: 128, 128>}, {pipeline_mode = #tpu.pipeline_mode<synchronous>, transform_indices = @transform_10, window_bounds = array<i64: 128, 128>}, {pipeline_mode = #tpu.pipeline_mode<synchronous>, transform_indices = @transform_11, window_bounds = array<i64: 1, 128>}, {pipeline_mode = #tpu.pipeline_mode<synchronous>, transform_indices = @transform_12, window_bounds = array<i64: 128, 128>}]} {
    %c0 = arith.constant 0 : index
    %c0_0 = arith.constant 0 : index
    %0 = vector.load %arg1[%c0, %c0_0] : memref<128x128xbf16, #tpu.memory_space<vmem>>, vector<128x128xbf16>
    %c0_1 = arith.constant 0 : index
    %c0_2 = arith.constant 0 : index
    %1 = vector.load %arg2[%c0_1, %c0_2] : memref<128x1xf32, #tpu.memory_space<vmem>>, vector<128x1xf32>
    %c0_3 = arith.constant 0 : index
    %c0_4 = arith.constant 0 : index
    %2 = vector.load %arg3[%c0_3, %c0_4] : memref<128x128xbf16, #tpu.memory_space<vmem>>, vector<128x128xbf16>
    %cst = arith.constant dense<0.000000e+00> : vector<128x128xf32>
    %3 = tpu.matmul %0, %2, %cst {dimension_numbers = #tpu.dot_dimension_numbers<[1], [0], [0], [1], [0, 0, 1, 1], [], []>} : vector<128x128xbf16>, vector<128x128xbf16>, vector<128x128xf32> -> vector<128x128xf32>
    %4 = vector.broadcast %1 : vector<128x1xf32> to vector<128x128xf32>
    %5 = arith.mulf %3, %4 : vector<128x128xf32>
    %6 = arith.truncf %5 : vector<128x128xf32> to vector<128x128xbf16>
    %c0_5 = arith.constant 0 : index
    %c0_6 = arith.constant 0 : index
    %7 = vector.load %arg4[%c0_5, %c0_6] : memref<128x128xbf16, #tpu.memory_space<vmem>>, vector<128x128xbf16>
    %cst_7 = arith.constant dense<0.000000e+00> : vector<128x128xf32>
    %8 = tpu.matmul %6, %7, %cst_7 {dimension_numbers = #tpu.dot_dimension_numbers<[1], [0], [0], [1], [0, 0, 1, 1], [], []>} : vector<128x128xbf16>, vector<128x128xbf16>, vector<128x128xf32> -> vector<128x128xf32>
    %c0_8 = arith.constant 0 : index
    %c0_9 = arith.constant 0 : index
    %9 = vector.load %arg5[%c0_8, %c0_9] : memref<128x128xbf16, #tpu.memory_space<vmem>>, vector<128x128xbf16>
    %cst_10 = arith.constant dense<0.000000e+00> : vector<128x128xf32>
    %10 = tpu.matmul %2, %9, %cst_10 {dimension_numbers = #tpu.dot_dimension_numbers<[1], [0], [0], [1], [0, 0, 1, 1], [], []>} : vector<128x128xbf16>, vector<128x128xbf16>, vector<128x128xf32> -> vector<128x128xf32>
    %11 = arith.addf %8, %10 : vector<128x128xf32>
    %c0_11 = arith.constant 0 : index
    %c0_12 = arith.constant 0 : index
    %12 = vector.load %arg6[%c0_11, %c0_12] : memref<1x128xf32, #tpu.memory_space<vmem>>, vector<1x128xf32>
    %13 = vector.broadcast %12 : vector<1x128xf32> to vector<128x128xf32>
    %14 = arith.addf %11, %13 : vector<128x128xf32>
    %cst_13 = arith.constant 0.000000e+00 : f32
    %15 = vector.broadcast %cst_13 : f32 to vector<128x128xf32>
    %16 = arith.maximumf %14, %15 : vector<128x128xf32>
    %17 = arith.truncf %16 : vector<128x128xf32> to vector<128x128xbf16>
    %cst_14 = arith.constant dense<0.000000e+00> : vector<128x128xf32>
    %18 = tpu.matmul %0, %17, %cst_14 {dimension_numbers = #tpu.dot_dimension_numbers<[1], [0], [0], [1], [0, 0, 1, 1], [], []>} : vector<128x128xbf16>, vector<128x128xbf16>, vector<128x128xf32> -> vector<128x128xf32>
    %19 = vector.broadcast %1 : vector<128x1xf32> to vector<128x128xf32>
    %20 = arith.mulf %18, %19 : vector<128x128xf32>
    %21 = arith.truncf %20 : vector<128x128xf32> to vector<128x128xbf16>
    %c0_15 = arith.constant 0 : index
    %c0_16 = arith.constant 0 : index
    %22 = vector.load %arg7[%c0_15, %c0_16] : memref<128x128xbf16, #tpu.memory_space<vmem>>, vector<128x128xbf16>
    %cst_17 = arith.constant dense<0.000000e+00> : vector<128x128xf32>
    %23 = tpu.matmul %21, %22, %cst_17 {dimension_numbers = #tpu.dot_dimension_numbers<[1], [0], [0], [1], [0, 0, 1, 1], [], []>} : vector<128x128xbf16>, vector<128x128xbf16>, vector<128x128xf32> -> vector<128x128xf32>
    %c0_18 = arith.constant 0 : index
    %c0_19 = arith.constant 0 : index
    %24 = vector.load %arg8[%c0_18, %c0_19] : memref<128x128xbf16, #tpu.memory_space<vmem>>, vector<128x128xbf16>
    %cst_20 = arith.constant dense<0.000000e+00> : vector<128x128xf32>
    %25 = tpu.matmul %17, %24, %cst_20 {dimension_numbers = #tpu.dot_dimension_numbers<[1], [0], [0], [1], [0, 0, 1, 1], [], []>} : vector<128x128xbf16>, vector<128x128xbf16>, vector<128x128xf32> -> vector<128x128xf32>
    %26 = arith.addf %23, %25 : vector<128x128xf32>
    %c0_21 = arith.constant 0 : index
    %c0_22 = arith.constant 0 : index
    %27 = vector.load %arg9[%c0_21, %c0_22] : memref<1x128xf32, #tpu.memory_space<vmem>>, vector<1x128xf32>
    %28 = vector.broadcast %27 : vector<1x128xf32> to vector<128x128xf32>
    %29 = arith.addf %26, %28 : vector<128x128xf32>
    %cst_23 = arith.constant 0.000000e+00 : f32
    %30 = vector.broadcast %cst_23 : f32 to vector<128x128xf32>
    %31 = arith.maximumf %29, %30 : vector<128x128xf32>
    %32 = arith.truncf %31 : vector<128x128xf32> to vector<128x128xbf16>
    %cst_24 = arith.constant dense<0.000000e+00> : vector<128x128xf32>
    %33 = tpu.matmul %0, %32, %cst_24 {dimension_numbers = #tpu.dot_dimension_numbers<[1], [0], [0], [1], [0, 0, 1, 1], [], []>} : vector<128x128xbf16>, vector<128x128xbf16>, vector<128x128xf32> -> vector<128x128xf32>
    %34 = vector.broadcast %1 : vector<128x1xf32> to vector<128x128xf32>
    %35 = arith.mulf %33, %34 : vector<128x128xf32>
    %36 = arith.truncf %35 : vector<128x128xf32> to vector<128x128xbf16>
    %c0_25 = arith.constant 0 : index
    %c0_26 = arith.constant 0 : index
    %37 = vector.load %arg10[%c0_25, %c0_26] : memref<128x128xbf16, #tpu.memory_space<vmem>>, vector<128x128xbf16>
    %cst_27 = arith.constant dense<0.000000e+00> : vector<128x128xf32>
    %38 = tpu.matmul %36, %37, %cst_27 {dimension_numbers = #tpu.dot_dimension_numbers<[1], [0], [0], [1], [0, 0, 1, 1], [], []>} : vector<128x128xbf16>, vector<128x128xbf16>, vector<128x128xf32> -> vector<128x128xf32>
    %c0_28 = arith.constant 0 : index
    %c0_29 = arith.constant 0 : index
    %39 = vector.load %arg11[%c0_28, %c0_29] : memref<128x128xbf16, #tpu.memory_space<vmem>>, vector<128x128xbf16>
    %cst_30 = arith.constant dense<0.000000e+00> : vector<128x128xf32>
    %40 = tpu.matmul %32, %39, %cst_30 {dimension_numbers = #tpu.dot_dimension_numbers<[1], [0], [0], [1], [0, 0, 1, 1], [], []>} : vector<128x128xbf16>, vector<128x128xbf16>, vector<128x128xf32> -> vector<128x128xf32>
    %41 = arith.addf %38, %40 : vector<128x128xf32>
    %c0_31 = arith.constant 0 : index
    %c0_32 = arith.constant 0 : index
    %42 = vector.load %arg12[%c0_31, %c0_32] : memref<1x128xf32, #tpu.memory_space<vmem>>, vector<1x128xf32>
    %43 = vector.broadcast %42 : vector<1x128xf32> to vector<128x128xf32>
    %44 = arith.addf %41, %43 : vector<128x128xf32>
    %c0_33 = arith.constant 0 : index
    %c0_34 = arith.constant 0 : index
    %45 = vector.load %arg13[%c0_33, %c0_34] : memref<128x128xf32, #tpu.memory_space<vmem>>, vector<128x128xf32>
    tpu.vector_store %arg13[%c0_33, %c0_34], %44 {strides = array<i32>} : memref<128x128xf32, #tpu.memory_space<vmem>>, vector<128x128xf32>,
    return
  }
  func.func @transform_0(%arg0: i32) -> (i32, i32) {
    %c0_i32 = arith.constant 0 : i32
    %c0_i32_0 = arith.constant 0 : i32
    %c0_i32_1 = arith.constant 0 : i32
    return %c0_i32, %c0_i32_0 : i32, i32
  }
  func.func @transform_1(%arg0: i32) -> (i32, i32) {
    %c0_i32 = arith.constant 0 : i32
    %c0_i32_0 = arith.constant 0 : i32
    %c0_i32_1 = arith.constant 0 : i32
    return %c0_i32, %c0_i32_0 : i32, i32
  }
  func.func @transform_2(%arg0: i32) -> (i32, i32) {
    %c0_i32 = arith.constant 0 : i32
    %c0_i32_0 = arith.constant 0 : i32
    %c0_i32_1 = arith.constant 0 : i32
    return %c0_i32, %c0_i32_0 : i32, i32
  }
  func.func @transform_3(%arg0: i32) -> (i32, i32) {
    %c0_i32 = arith.constant 0 : i32
    %c0_i32_0 = arith.constant 0 : i32
    %c0_i32_1 = arith.constant 0 : i32
    return %c0_i32, %c0_i32_0 : i32, i32
  }
  func.func @transform_4(%arg0: i32) -> (i32, i32) {
    %c0_i32 = arith.constant 0 : i32
    %c0_i32_0 = arith.constant 0 : i32
    %c0_i32_1 = arith.constant 0 : i32
    return %c0_i32, %c0_i32_0 : i32, i32
  }
  func.func @transform_5(%arg0: i32) -> (i32, i32) {
    %c0_i32 = arith.constant 0 : i32
    %c0_i32_0 = arith.constant 0 : i32
    %c0_i32_1 = arith.constant 0 : i32
    return %c0_i32, %c0_i32_0 : i32, i32
  }
  func.func @transform_6(%arg0: i32) -> (i32, i32) {
    %c0_i32 = arith.constant 0 : i32
    %c0_i32_0 = arith.constant 0 : i32
    %c0_i32_1 = arith.constant 0 : i32
    return %c0_i32, %c0_i32_0 : i32, i32
  }
  func.func @transform_7(%arg0: i32) -> (i32, i32) {
    %c0_i32 = arith.constant 0 : i32
    %c0_i32_0 = arith.constant 0 : i32
    %c0_i32_1 = arith.constant 0 : i32
    return %c0_i32, %c0_i32_0 : i32, i32
  }
  func.func @transform_8(%arg0: i32) -> (i32, i32) {
    %c0_i32 = arith.constant 0 : i32
    %c0_i32_0 = arith.constant 0 : i32
    %c0_i32_1 = arith.constant 0 : i32
    return %c0_i32, %c0_i32_0 : i32, i32
  }
  func.func @transform_9(%arg0: i32) -> (i32, i32) {
    %c0_i32 = arith.constant 0 : i32
    %c0_i32_0 = arith.constant 0 : i32
    %c0_i32_1 = arith.constant 0 : i32
    return %c0_i32, %c0_i32_0 : i32, i32
  }
  func.func @transform_10(%arg0: i32) -> (i32, i32) {
    %c0_i32 = arith.constant 0 : i32
    %c0_i32_0 = arith.constant 0 : i32
    %c0_i32_1 = arith.constant 0 : i32
    return %c0_i32, %c0_i32_0 : i32, i32
  }
  func.func @transform_11(%arg0: i32) -> (i32, i32) {
    %c0_i32 = arith.constant 0 : i32
    %c0_i32_0 = arith.constant 0 : i32
    %c0_i32_1 = arith.constant 0 : i32
    return %c0_i32, %c0_i32_0 : i32, i32
  }
  func.func @transform_12(%arg0: i32) -> (i32, i32) {
    %c0_i32 = arith.constant 0 : i32
    %c0_i32_0 = arith.constant 0 : i32
    %c0_i32_1 = arith.constant 0 : i32
    return %c0_i32, %c0_i32_0 : i32, i32
  }
}

</mosaic_0001>

<llo_original>
// kernel: sage_forward.1
$region0: #{sage_forward.1}
  #allocation0 [shape = 'u32[]', space=smem, size = 0x4, offset = 0x4, fixed_abs, tag = 'smem constant byte address 0x4 - core index']
  #allocation1 [shape = 'u32[144,128]{1,0:T(1,128)}', space=vmem, size = 0x12000, scoped, tag = 'internal scratch']
  %s0 = inlined_call_operand.vmem [shape: bf16[128,128], index: 0, kind: input, shape index: {}]
  %s1 = inlined_call_operand.vmem [shape: f32[128,1], index: 1, kind: input, shape index: {}]
  %s2 = inlined_call_operand.vmem [shape: bf16[128,128], index: 2, kind: input, shape index: {}]
  %s3 = inlined_call_operand.vmem [shape: bf16[128,128], index: 3, kind: input, shape index: {}]
  %s4 = inlined_call_operand.vmem [shape: bf16[128,128], index: 4, kind: input, shape index: {}]
  %s5 = inlined_call_operand.vmem [shape: f32[1,128], index: 5, kind: input, shape index: {}]
  %s6 = inlined_call_operand.vmem [shape: bf16[128,128], index: 6, kind: input, shape index: {}]
  %s7 = inlined_call_operand.vmem [shape: bf16[128,128], index: 7, kind: input, shape index: {}]
  %s8 = inlined_call_operand.vmem [shape: f32[1,128], index: 8, kind: input, shape index: {}]
  %s9 = inlined_call_operand.vmem [shape: bf16[128,128], index: 9, kind: input, shape index: {}]
  %s10 = inlined_call_operand.vmem [shape: bf16[128,128], index: 10, kind: input, shape index: {}]
  %s11 = inlined_call_operand.vmem [shape: f32[1,128], index: 11, kind: input, shape index: {}]
  %s12 = inlined_call_operand.vmem [shape: f32[128,128], index: 12, kind: output, shape index: {}]
  %s13 = sld [smem:[#allocation0]]
  $region58: #{sage_forward.1} parent=0
    _
  %s15 = ssub.s32 1, %s13
  %s16 = scalar_select 0, %s15, %s13
  // Predicated region
  $region2: #{sage_forward.1} parent=0 // pred_check
    _
  $region3: #{sage_forward.1} parent=0 // pred_check_branch
    %18 = sbr.rel (0) target = $region5
  $region4: #{sage_forward.1} parent=0 // pred_region
    _
  $region5: #{sage_forward.1} parent=0 // pred_fallthru
    _
  // Predicated region
  $region6: #{sage_forward.1} parent=0 // pred_check
    _
  $region7: #{sage_forward.1} parent=0 // pred_check_branch
    %20 = sbr.rel (0) target = $region9
  $region8: #{sage_forward.1} parent=0 // pred_region
    _
  $region9: #{sage_forward.1} parent=0 // pred_fallthru
    _
  // Predicated region
  $region10: #{sage_forward.1} parent=0 // pred_check
    _
  $region11: #{sage_forward.1} parent=0 // pred_check_branch
    %22 = sbr.rel (0) target = $region13
  $region12: #{sage_forward.1} parent=0 // pred_region
    _
  $region13: #{sage_forward.1} parent=0 // pred_fallthru
    _
  // Predicated region
  $region14: #{sage_forward.1} parent=0 // pred_check
    _
  $region15: #{sage_forward.1} parent=0 // pred_check_branch
    %24 = sbr.rel (0) target = $region17
  $region16: #{sage_forward.1} parent=0 // pred_region
    _
  $region17: #{sage_forward.1} parent=0 // pred_fallthru
    _
  // Predicated region
  $region18: #{sage_forward.1} parent=0 // pred_check
    _
  $region19: #{sage_forward.1} parent=0 // pred_check_branch
    %26 = sbr.rel (0) target = $region21
  $region20: #{sage_forward.1} parent=0 // pred_region
    _
  $region21: #{sage_forward.1} parent=0 // pred_fallthru
    _
  // Predicated region
  $region22: #{sage_forward.1} parent=0 // pred_check
    _
  $region23: #{sage_forward.1} parent=0 // pred_check_branch
    %28 = sbr.rel (0) target = $region25
  $region24: #{sage_forward.1} parent=0 // pred_region
    _
  $region25: #{sage_forward.1} parent=0 // pred_fallthru
    _
  // Predicated region
  $region26: #{sage_forward.1} parent=0 // pred_check
    _
  $region27: #{sage_forward.1} parent=0 // pred_check_branch
    %30 = sbr.rel (0) target = $region29
  $region28: #{sage_forward.1} parent=0 // pred_region
    _
  $region29: #{sage_forward.1} parent=0 // pred_fallthru
    _
  // Predicated region
  $region30: #{sage_forward.1} parent=0 // pred_check
    _
  $region31: #{sage_forward.1} parent=0 // pred_check_branch
    %32 = sbr.rel (0) target = $region33
  $region32: #{sage_forward.1} parent=0 // pred_region
    _
  $region33: #{sage_forward.1} parent=0 // pred_fallthru
    _
  // Predicated region
  $region34: #{sage_forward.1} parent=0 // pred_check
    _
  $region35: #{sage_forward.1} parent=0 // pred_check_branch
    %34 = sbr.rel (0) target = $region37
  $region36: #{sage_forward.1} parent=0 // pred_region
    _
  $region37: #{sage_forward.1} parent=0 // pred_fallthru
    _
  // Predicated region
  $region38: #{sage_forward.1} parent=0 // pred_check
    _
  $region39: #{sage_forward.1} parent=0 // pred_check_branch
    %36 = sbr.rel (0) target = $region41
  $region40: #{sage_forward.1} parent=0 // pred_region
    _
  $region41: #{sage_forward.1} parent=0 // pred_fallthru
    _
  // Predicated region
  $region42: #{sage_forward.1} parent=0 // pred_check
    _
  $region43: #{sage_forward.1} parent=0 // pred_check_branch
    %38 = sbr.rel (0) target = $region45
  $region44: #{sage_forward.1} parent=0 // pred_region
    _
  $region45: #{sage_forward.1} parent=0 // pred_fallthru
    _
  // Predicated region
  $region46: #{sage_forward.1} parent=0 // pred_check
    _
  $region47: #{sage_forward.1} parent=0 // pred_check_branch
    %40 = sbr.rel (0) target = $region49
  $region48: #{sage_forward.1} parent=0 // pred_region
    _
  $region49: #{sage_forward.1} parent=0 // pred_fallthru
    _
  %v42 = vld [vmem:[%s0] sm:$0xf]
  %v43 = vld [vmem:[%s0 + $0x4] sm:$0xf]
  %v44 = vld [vmem:[%s0 + $0x8] sm:$0xf]
  %v45 = vld [vmem:[%s0 + $0xc] sm:$0xf]
  %v46 = vld [vmem:[%s0 + $0x10] sm:$0xf]
  %v47 = vld [vmem:[%s0 + $0x14] sm:$0xf]
  %v48 = vld [vmem:[%s0 + $0x18] sm:$0xf]
  %v49 = vld [vmem:[%s0 + $0x1c] sm:$0xf]
  %v50 = vld [vmem:[%s0 + $0x20] sm:$0xf]
  %v51 = vld [vmem:[%s0 + $0x24] sm:$0xf]
  %v52 = vld [vmem:[%s0 + $0x28] sm:$0xf]
  %v53 = vld [vmem:[%s0 + $0x2c] sm:$0xf]
  %v54 = vld [vmem:[%s0 + $0x30] sm:$0xf]
  %v55 = vld [vmem:[%s0 + $0x34] sm:$0xf]
  %v56 = vld [vmem:[%s0 + $0x38] sm:$0xf]
  %v57 = vld [vmem:[%s0 + $0x3c] sm:$0xf]
  %v58 = vld [vmem:[%s1] sm:$0xff]
  %v59 = vld [vmem:[%s1 + $0x8] sm:$0xff]
  %v60 = vld [vmem:[%s1 + $0x10] sm:$0xff]
  %v61 = vld [vmem:[%s1 + $0x18] sm:$0xff]
  %v62 = vld [vmem:[%s1 + $0x20] sm:$0xff]
  %v63 = vld [vmem:[%s1 + $0x28] sm:$0xff]
  %v64 = vld [vmem:[%s1 + $0x30] sm:$0xff]
  %v65 = vld [vmem:[%s1 + $0x38] sm:$0xff]
  %v66 = vld [vmem:[%s1 + $0x40] sm:$0xff]
  %v67 = vld [vmem:[%s1 + $0x48] sm:$0xff]
  %v68 = vld [vmem:[%s1 + $0x50] sm:$0xff]
  %v69 = vld [vmem:[%s1 + $0x58] sm:$0xff]
  %v70 = vld [vmem:[%s1 + $0x60] sm:$0xff]
  %v71 = vld [vmem:[%s1 + $0x68] sm:$0xff]
  %v72 = vld [vmem:[%s1 + $0x70] sm:$0xff]
  %v73 = vld [vmem:[%s1 + $0x78] sm:$0xff]
  %v74 = vld [vmem:[%s2] sm:$0xf]
  %v75 = vld [vmem:[%s2 + $0x4] sm:$0xf]
  %v76 = vld [vmem:[%s2 + $0x8] sm:$0xf]
  %v77 = vld [vmem:[%s2 + $0xc] sm:$0xf]
  %v78 = vld [vmem:[%s2 + $0x10] sm:$0xf]
  %v79 = vld [vmem:[%s2 + $0x14] sm:$0xf]
  %v80 = vld [vmem:[%s2 + $0x18] sm:$0xf]
  %v81 = vld [vmem:[%s2 + $0x1c] sm:$0xf]
  %v82 = vld [vmem:[%s2 + $0x20] sm:$0xf]
  %v83 = vld [vmem:[%s2 + $0x24] sm:$0xf]
  %v84 = vld [vmem:[%s2 + $0x28] sm:$0xf]
  %v85 = vld [vmem:[%s2 + $0x2c] sm:$0xf]
  %v86 = vld [vmem:[%s2 + $0x30] sm:$0xf]
  %v87 = vld [vmem:[%s2 + $0x34] sm:$0xf]
  %v88 = vld [vmem:[%s2 + $0x38] sm:$0xf]
  %v89 = vld [vmem:[%s2 + $0x3c] sm:$0xf]
  %v106 = vunpack.c.l.b16 %v42
  %v107 = vunpack.c.l.b16 %v43
  %v108 = vunpack.c.l.b16 %v44
  %v109 = vunpack.c.l.b16 %v45
  %v110 = vunpack.c.l.b16 %v46
  %v111 = vunpack.c.l.b16 %v47
  %v112 = vunpack.c.l.b16 %v48
  %v113 = vunpack.c.l.b16 %v49
  %v114 = vunpack.c.l.b16 %v50
  %v115 = vunpack.c.l.b16 %v51
  %v116 = vunpack.c.l.b16 %v52
  %v117 = vunpack.c.l.b16 %v53
  %v118 = vunpack.c.l.b16 %v54
  %v119 = vunpack.c.l.b16 %v55
  %v120 = vunpack.c.l.b16 %v56
  %v121 = vunpack.c.l.b16 %v57
  %v122 = vpack.c.b16 %v107, %v106
  %v123 = vpack.c.b16 %v109, %v108
  %v124 = vpack.c.b16 %v111, %v110
  %v125 = vpack.c.b16 %v113, %v112
  %v126 = vpack.c.b16 %v115, %v114
  %v127 = vpack.c.b16 %v117, %v116
  %v128 = vpack.c.b16 %v119, %v118
  %v129 = vpack.c.b16 %v121, %v120
  %v154 = vunpack.c.l.b16 %v74
  %v155 = vunpack.c.l.b16 %v75
  %v156 = vunpack.c.l.b16 %v76
  %v157 = vunpack.c.l.b16 %v77
  %v158 = vunpack.c.l.b16 %v78
  %v159 = vunpack.c.l.b16 %v79
  %v160 = vunpack.c.l.b16 %v80
  %v161 = vunpack.c.l.b16 %v81
  %v162 = vunpack.c.l.b16 %v82
  %v163 = vunpack.c.l.b16 %v83
  %v164 = vunpack.c.l.b16 %v84
  %v165 = vunpack.c.l.b16 %v85
  %v166 = vunpack.c.l.b16 %v86
  %v167 = vunpack.c.l.b16 %v87
  %v168 = vunpack.c.l.b16 %v88
  %v169 = vunpack.c.l.b16 %v89
  %v170 = vpack.c.b16 %v155, %v154
  %v171 = vpack.c.b16 %v157, %v156
  %v172 = vpack.c.b16 %v159, %v158
  %v173 = vpack.c.b16 %v161, %v160
  %v174 = vpack.c.b16 %v163, %v162
  %v175 = vpack.c.b16 %v165, %v164
  %v176 = vpack.c.b16 %v167, %v166
  %v177 = vpack.c.b16 %v169, %v168
  %186 = vmatprep.subr.bf16.mxu0 0
  %187 = vmatpush1.bf16.msra.mxu0 %v170
  %188 = vmatprep.subr.bf16.mxu0 0
  %189 = vmatpush1.bf16.msra.mxu0 %v171
  %190 = vmatprep.subr.bf16.mxu0 0
  %191 = vmatpush1.bf16.msra.mxu0 %v172
  %192 = vmatprep.subr.bf16.mxu0 0
  %193 = vmatpush1.bf16.msra.mxu0 %v173
  %194 = vmatprep.subr.bf16.mxu0 0
  %195 = vmatpush1.bf16.msra.mxu0 %v174
  %196 = vmatprep.subr.bf16.mxu0 0
  %197 = vmatpush1.bf16.msra.mxu0 %v175
  %198 = vmatprep.subr.bf16.mxu0 0
  %199 = vmatpush1.bf16.msra.mxu0 %v176
  %200 = vmatprep.subr.bf16.mxu0 0
  %201 = vmatpush1.bf16.msra.mxu0 %v177
  %202 = vmatprep.subr.bf16.mxu0 0
  %203 = vmatpush1.bf16.msra.mxu0 0
  %204 = vmatprep.subr.bf16.mxu0 0
  %205 = vmatpush1.bf16.msra.mxu0 0
  %206 = vmatprep.subr.bf16.mxu0 0
  %207 = vmatpush1.bf16.msra.mxu0 0
  %208 = vmatprep.subr.bf16.mxu0 0
  %209 = vmatpush1.bf16.msra.mxu0 0
  %210 = vmatprep.subr.bf16.mxu0 0
  %211 = vmatpush1.bf16.msra.mxu0 0
  %212 = vmatprep.subr.bf16.mxu0 0
  %213 = vmatpush1.bf16.msra.mxu0 0
  %214 = vmatprep.subr.bf16.mxu0 0
  %215 = vmatpush1.bf16.msra.mxu0 0
  %216 = vmatprep.subr.bf16.mxu0 0
  %217 = vmatpush1.bf16.msra.mxu0 0
  %218 = vmatprep.mubr.bf16.mxu0 0
  %219 = vmatmul.mubr.bf16.gmra.mrb[0].mxu0 %v122
  %v220 = vpop.f32.mrb[0].mxu0
  %v221 = vadd.f32 0.0, %v220
  %v222 = vpop.f32.mrb[0].mxu0
  %v223 = vpop.f32.mrb[0].mxu0
  %v224 = vadd.f32 0.0, %v223
  %v225 = vpop.f32.mrb[0].mxu0
  %226 = vmatprep.mubr.bf16.mxu0 0
  %227 = vmatmul.mubr.bf16.gmra.mrb[0].mxu0 %v123
  %v228 = vpop.f32.mrb[0].mxu0
  %v229 = vadd.f32 0.0, %v228
  %v230 = vpop.f32.mrb[0].mxu0
  %v231 = vpop.f32.mrb[0].mxu0
  %v232 = vadd.f32 0.0, %v231
  %v233 = vpop.f32.mrb[0].mxu0
  %234 = vmatprep.mubr.bf16.mxu0 0
  %235 = vmatmul.mubr.bf16.gmra.mrb[0].mxu0 %v124
  %v236 = vpop.f32.mrb[0].mxu0
  %v237 = vadd.f32 0.0, %v236
  %v238 = vpop.f32.mrb[0].mxu0
  %v239 = vpop.f32.mrb[0].mxu0
  %v240 = vadd.f32 0.0, %v239
  %v241 = vpop.f32.mrb[0].mxu0
  %242 = vmatprep.mubr.bf16.mxu0 0
  %243 = vmatmul.mubr.bf16.gmra.mrb[0].mxu0 %v125
  %v244 = vpop.f32.mrb[0].mxu0
  %v245 = vadd.f32 0.0, %v244
  %v246 = vpop.f32.mrb[0].mxu0
  %v247 = vpop.f32.mrb[0].mxu0
  %v248 = vadd.f32 0.0, %v247
  %v249 = vpop.f32.mrb[0].mxu0
  %250 = vmatprep.mubr.bf16.mxu0 0
  %251 = vmatmul.mubr.bf16.gmra.mrb[0].mxu0 %v126
  %v252 = vpop.f32.mrb[0].mxu0
  %v253 = vadd.f32 0.0, %v252
  %v254 = vpop.f32.mrb[0].mxu0
  %v255 = vpop.f32.mrb[0].mxu0
  %v256 = vadd.f32 0.0, %v255
  %v257 = vpop.f32.mrb[0].mxu0
  %258 = vmatprep.mubr.bf16.mxu0 0
  %259 = vmatmul.mubr.bf16.gmra.mrb[0].mxu0 %v127
  %v260 = vpop.f32.mrb[0].mxu0
  %v261 = vadd.f32 0.0, %v260
  %v262 = vpop.f32.mrb[0].mxu0
  %v263 = vpop.f32.mrb[0].mxu0
  %v264 = vadd.f32 0.0, %v263
  %v265 = vpop.f32.mrb[0].mxu0
  %266 = vmatprep.mubr.bf16.mxu0 0
  %267 = vmatmul.mubr.bf16.gmra.mrb[0].mxu0 %v128
  %v268 = vpop.f32.mrb[0].mxu0
  %v269 = vadd.f32 0.0, %v268
  %v270 = vpop.f32.mrb[0].mxu0
  %v271 = vpop.f32.mrb[0].mxu0
  %v272 = vadd.f32 0.0, %v271
  %v273 = vpop.f32.mrb[0].mxu0
  %274 = vmatprep.mubr.bf16.mxu0 0
  %275 = vmatmul.mubr.bf16.gmra.mrb[0].mxu0 %v129
  %v276 = vpop.f32.mrb[0].mxu0
  %v277 = vadd.f32 0.0, %v276
  %v278 = vpop.f32.mrb[0].mxu0
  %v279 = vpop.f32.mrb[0].mxu0
  %v280 = vadd.f32 0.0, %v279
  %v281 = vpop.f32.mrb[0].mxu0
  %282 = vdwg.mxu0
  %284 = vset.pattern.permute.xlu0 0
  %285 = vperm.xlu0 %284, %v58
  %v286 = vpop.permute.xlu0 %285
  %289 = vset.pattern.permute.xlu0 0
  %290 = vperm.xlu0 %289, %v59
  %v291 = vpop.permute.xlu0 %290
  %294 = vset.pattern.permute.xlu0 0
  %295 = vperm.xlu0 %294, %v60
  %v296 = vpop.permute.xlu0 %295
  %299 = vset.pattern.permute.xlu0 0
  %300 = vperm.xlu0 %299, %v61
  %v301 = vpop.permute.xlu0 %300
  %304 = vset.pattern.permute.xlu0 0
  %305 = vperm.xlu0 %304, %v62
  %v306 = vpop.permute.xlu0 %305
  %309 = vset.pattern.permute.xlu0 0
  %310 = vperm.xlu0 %309, %v63
  %v311 = vpop.permute.xlu0 %310
  %314 = vset.pattern.permute.xlu0 0
  %315 = vperm.xlu0 %314, %v64
  %v316 = vpop.permute.xlu0 %315
  %319 = vset.pattern.permute.xlu0 0
  %320 = vperm.xlu0 %319, %v65
  %v321 = vpop.permute.xlu0 %320
  %324 = vset.pattern.permute.xlu0 0
  %325 = vperm.xlu0 %324, %v66
  %v326 = vpop.permute.xlu0 %325
  %329 = vset.pattern.permute.xlu0 0
  %330 = vperm.xlu0 %329, %v67
  %v331 = vpop.permute.xlu0 %330
  %334 = vset.pattern.permute.xlu0 0
  %335 = vperm.xlu0 %334, %v68
  %v336 = vpop.permute.xlu0 %335
  %339 = vset.pattern.permute.xlu0 0
  %340 = vperm.xlu0 %339, %v69
  %v341 = vpop.permute.xlu0 %340
  %344 = vset.pattern.permute.xlu0 0
  %345 = vperm.xlu0 %344, %v70
  %v346 = vpop.permute.xlu0 %345
  %349 = vset.pattern.permute.xlu0 0
  %350 = vperm.xlu0 %349, %v71
  %v351 = vpop.permute.xlu0 %350
  %354 = vset.pattern.permute.xlu0 0
  %355 = vperm.xlu0 %354, %v72
  %v356 = vpop.permute.xlu0 %355
  %359 = vset.pattern.permute.xlu0 0
  %360 = vperm.xlu0 %359, %v73
  %v361 = vpop.permute.xlu0 %360
  %v363 = vmul.f32 %v221, %v286
  %v364 = vmul.f32 %v224, %v291
  %v365 = vmul.f32 %v229, %v296
  %v366 = vmul.f32 %v232, %v301
  %v367 = vmul.f32 %v237, %v306
  %v368 = vmul.f32 %v240, %v311
  %v369 = vmul.f32 %v245, %v316
  %v370 = vmul.f32 %v248, %v321
  %v371 = vmul.f32 %v253, %v326
  %v372 = vmul.f32 %v256, %v331
  %v373 = vmul.f32 %v261, %v336
  %v374 = vmul.f32 %v264, %v341
  %v375 = vmul.f32 %v269, %v346
  %v376 = vmul.f32 %v272, %v351
  %v377 = vmul.f32 %v277, %v356
  %v378 = vmul.f32 %v280, %v361
  %v379 = vpack.c.bf16 %v364, %v363
  %v380 = vpack.c.bf16 %v366, %v365
  %v381 = vpack.c.bf16 %v368, %v367
  %v382 = vpack.c.bf16 %v370, %v369
  %v383 = vpack.c.bf16 %v372, %v371
  %v384 = vpack.c.bf16 %v374, %v373
  %v385 = vpack.c.bf16 %v376, %v375
  %v386 = vpack.c.bf16 %v378, %v377
  %v387 = vld [vmem:[%s3] sm:$0xf]
  %v388 = vld [vmem:[%s3 + $0x4] sm:$0xf]
  %v389 = vld [vmem:[%s3 + $0x8] sm:$0xf]
  %v390 = vld [vmem:[%s3 + $0xc] sm:$0xf]
  %v391 = vld [vmem:[%s3 + $0x10] sm:$0xf]
  %v392 = vld [vmem:[%s3 + $0x14] sm:$0xf]
  %v393 = vld [vmem:[%s3 + $0x18] sm:$0xf]
  %v394 = vld [vmem:[%s3 + $0x1c] sm:$0xf]
  %v395 = vld [vmem:[%s3 + $0x20] sm:$0xf]
  %v396 = vld [vmem:[%s3 + $0x24] sm:$0xf]
  %v397 = vld [vmem:[%s3 + $0x28] sm:$0xf]
  %v398 = vld [vmem:[%s3 + $0x2c] sm:$0xf]
  %v399 = vld [vmem:[%s3 + $0x30] sm:$0xf]
  %v400 = vld [vmem:[%s3 + $0x34] sm:$0xf]
  %v401 = vld [vmem:[%s3 + $0x38] sm:$0xf]
  %v402 = vld [vmem:[%s3 + $0x3c] sm:$0xf]
  %v403 = vld [vmem:[%s4] sm:$0xf]
  %v404 = vld [vmem:[%s4 + $0x4] sm:$0xf]
  %v405 = vld [vmem:[%s4 + $0x8] sm:$0xf]
  %v406 = vld [vmem:[%s4 + $0xc] sm:$0xf]
  %v407 = vld [vmem:[%s4 + $0x10] sm:$0xf]
  %v408 = vld [vmem:[%s4 + $0x14] sm:$0xf]
  %v409 = vld [vmem:[%s4 + $0x18] sm:$0xf]
  %v410 = vld [vmem:[%s4 + $0x1c] sm:$0xf]
  %v411 = vld [vmem:[%s4 + $0x20] sm:$0xf]
  %v412 = vld [vmem:[%s4 + $0x24] sm:$0xf]
  %v413 = vld [vmem:[%s4 + $0x28] sm:$0xf]
  %v414 = vld [vmem:[%s4 + $0x2c] sm:$0xf]
  %v415 = vld [vmem:[%s4 + $0x30] sm:$0xf]
  %v416 = vld [vmem:[%s4 + $0x34] sm:$0xf]
  %v417 = vld [vmem:[%s4 + $0x38] sm:$0xf]
  %v418 = vld [vmem:[%s4 + $0x3c] sm:$0xf]
  %v435 = vunpack.c.l.b16 %v403
  %v436 = vunpack.c.l.b16 %v404
  %v437 = vunpack.c.l.b16 %v405
  %v438 = vunpack.c.l.b16 %v406
  %v439 = vunpack.c.l.b16 %v407
  %v440 = vunpack.c.l.b16 %v408
  %v441 = vunpack.c.l.b16 %v409
  %v442 = vunpack.c.l.b16 %v410
  %v443 = vunpack.c.l.b16 %v411
  %v444 = vunpack.c.l.b16 %v412
  %v445 = vunpack.c.l.b16 %v413
  %v446 = vunpack.c.l.b16 %v414
  %v447 = vunpack.c.l.b16 %v415
  %v448 = vunpack.c.l.b16 %v416
  %v449 = vunpack.c.l.b16 %v417
  %v450 = vunpack.c.l.b16 %v418
  %v451 = vpack.c.b16 %v436, %v435
  %v452 = vpack.c.b16 %v438, %v437
  %v453 = vpack.c.b16 %v440, %v439
  %v454 = vpack.c.b16 %v442, %v441
  %v455 = vpack.c.b16 %v444, %v443
  %v456 = vpack.c.b16 %v446, %v445
  %v457 = vpack.c.b16 %v448, %v447
  %v458 = vpack.c.b16 %v450, %v449
  %467 = vmatprep.subr.bf16.mxu0 0
  %468 = vmatpush1.bf16.msra.mxu0 %v451
  %469 = vmatprep.subr.bf16.mxu0 0
  %470 = vmatpush1.bf16.msra.mxu0 %v452
  %471 = vmatprep.subr.bf16.mxu0 0
  %472 = vmatpush1.bf16.msra.mxu0 %v453
  %473 = vmatprep.subr.bf16.mxu0 0
  %474 = vmatpush1.bf16.msra.mxu0 %v454
  %475 = vmatprep.subr.bf16.mxu0 0
  %476 = vmatpush1.bf16.msra.mxu0 %v455
  %477 = vmatprep.subr.bf16.mxu0 0
  %478 = vmatpush1.bf16.msra.mxu0 %v456
  %479 = vmatprep.subr.bf16.mxu0 0
  %480 = vmatpush1.bf16.msra.mxu0 %v457
  %481 = vmatprep.subr.bf16.mxu0 0
  %482 = vmatpush1.bf16.msra.mxu0 %v458
  %483 = vmatprep.subr.bf16.mxu0 0
  %484 = vmatpush1.bf16.msra.mxu0 0
  %485 = vmatprep.subr.bf16.mxu0 0
  %486 = vmatpush1.bf16.msra.mxu0 0
  %487 = vmatprep.subr.bf16.mxu0 0
  %488 = vmatpush1.bf16.msra.mxu0 0
  %489 = vmatprep.subr.bf16.mxu0 0
  %490 = vmatpush1.bf16.msra.mxu0 0
  %491 = vmatprep.subr.bf16.mxu0 0
  %492 = vmatpush1.bf16.msra.mxu0 0
  %493 = vmatprep.subr.bf16.mxu0 0
  %494 = vmatpush1.bf16.msra.mxu0 0
  %495 = vmatprep.subr.bf16.mxu0 0
  %496 = vmatpush1.bf16.msra.mxu0 0
  %497 = vmatprep.subr.bf16.mxu0 0
  %498 = vmatpush1.bf16.msra.mxu0 0
  %499 = vmatprep.mubr.bf16.mxu0 0
  %500 = vmatmul.mubr.bf16.gmra.mrb[0].mxu0 %v170
  %v501 = vpop.f32.mrb[0].mxu0
  %v502 = vadd.f32 0.0, %v501
  %v503 = vpop.f32.mrb[0].mxu0
  %v504 = vpop.f32.mrb[0].mxu0
  %v505 = vadd.f32 0.0, %v504
  %v506 = vpop.f32.mrb[0].mxu0
  %507 = vmatprep.mubr.bf16.mxu0 0
  %508 = vmatmul.mubr.bf16.gmra.mrb[0].mxu0 %v171
  %v509 = vpop.f32.mrb[0].mxu0
  %v510 = vadd.f32 0.0, %v509
  %v511 = vpop.f32.mrb[0].mxu0
  %v512 = vpop.f32.mrb[0].mxu0
  %v513 = vadd.f32 0.0, %v512
  %v514 = vpop.f32.mrb[0].mxu0
  %515 = vmatprep.mubr.bf16.mxu0 0
  %516 = vmatmul.mubr.bf16.gmra.mrb[0].mxu0 %v172
  %v517 = vpop.f32.mrb[0].mxu0
  %v518 = vadd.f32 0.0, %v517
  %v519 = vpop.f32.mrb[0].mxu0
  %v520 = vpop.f32.mrb[0].mxu0
  %v521 = vadd.f32 0.0, %v520
  %v522 = vpop.f32.mrb[0].mxu0
  %523 = vmatprep.mubr.bf16.mxu0 0
  %524 = vmatmul.mubr.bf16.gmra.mrb[0].mxu0 %v173
  %v525 = vpop.f32.mrb[0].mxu0
  %v526 = vadd.f32 0.0, %v525
  %v527 = vpop.f32.mrb[0].mxu0
  %v528 = vpop.f32.mrb[0].mxu0
  %v529 = vadd.f32 0.0, %v528
  %v530 = vpop.f32.mrb[0].mxu0
  %531 = vmatprep.mubr.bf16.mxu0 0
  %532 = vmatmul.mubr.bf16.gmra.mrb[0].mxu0 %v174
  %v533 = vpop.f32.mrb[0].mxu0
  %v534 = vadd.f32 0.0, %v533
  %v535 = vpop.f32.mrb[0].mxu0
  %v536 = vpop.f32.mrb[0].mxu0
  %v537 = vadd.f32 0.0, %v536
  %v538 = vpop.f32.mrb[0].mxu0
  %539 = vmatprep.mubr.bf16.mxu0 0
  %540 = vmatmul.mubr.bf16.gmra.mrb[0].mxu0 %v175
  %v541 = vpop.f32.mrb[0].mxu0
  %v542 = vadd.f32 0.0, %v541
  %v543 = vpop.f32.mrb[0].mxu0
  %v544 = vpop.f32.mrb[0].mxu0
  %v545 = vadd.f32 0.0, %v544
  %v546 = vpop.f32.mrb[0].mxu0
  %547 = vmatprep.mubr.bf16.mxu0 0
  %548 = vmatmul.mubr.bf16.gmra.mrb[0].mxu0 %v176
  %v549 = vpop.f32.mrb[0].mxu0
  %v550 = vadd.f32 0.0, %v549
  %v551 = vpop.f32.mrb[0].mxu0
  %v552 = vpop.f32.mrb[0].mxu0
  %v553 = vadd.f32 0.0, %v552
  %v554 = vpop.f32.mrb[0].mxu0
  %555 = vmatprep.mubr.bf16.mxu0 0
  %556 = vmatmul.mubr.bf16.gmra.mrb[0].mxu0 %v177
  %v557 = vpop.f32.mrb[0].mxu0
  %v558 = vadd.f32 0.0, %v557
  %v559 = vpop.f32.mrb[0].mxu0
  %v560 = vpop.f32.mrb[0].mxu0
  %v561 = vadd.f32 0.0, %v560
  %v562 = vpop.f32.mrb[0].mxu0
  %563 = vdwg.mxu0
  %v580 = vunpack.c.l.b16 %v387
  %v581 = vunpack.c.l.b16 %v388
  %v582 = vunpack.c.l.b16 %v389
  %v583 = vunpack.c.l.b16 %v390
  %v584 = vunpack.c.l.b16 %v391
  %v585 = vunpack.c.l.b16 %v392
  %v586 = vunpack.c.l.b16 %v393
  %v587 = vunpack.c.l.b16 %v394
  %v588 = vunpack.c.l.b16 %v395
  %v589 = vunpack.c.l.b16 %v396
  %v590 = vunpack.c.l.b16 %v397
  %v591 = vunpack.c.l.b16 %v398
  %v592 = vunpack.c.l.b16 %v399
  %v593 = vunpack.c.l.b16 %v400
  %v594 = vunpack.c.l.b16 %v401
  %v595 = vunpack.c.l.b16 %v402
  %v596 = vpack.c.b16 %v581, %v580
  %v597 = vpack.c.b16 %v583, %v582
  %v598 = vpack.c.b16 %v585, %v584
  %v599 = vpack.c.b16 %v587, %v586
  %v600 = vpack.c.b16 %v589, %v588
  %v601 = vpack.c.b16 %v591, %v590
  %v602 = vpack.c.b16 %v593, %v592
  %v603 = vpack.c.b16 %v595, %v594
  %612 = vmatprep.subr.bf16.mxu0 0
  %613 = vmatpush1.bf16.msra.mxu0 %v596
  %614 = vmatprep.subr.bf16.mxu0 0
  %615 = vmatpush1.bf16.msra.mxu0 %v597
  %616 = vmatprep.subr.bf16.mxu0 0
  %617 = vmatpush1.bf16.msra.mxu0 %v598
  %618 = vmatprep.subr.bf16.mxu0 0
  %619 = vmatpush1.bf16.msra.mxu0 %v599
  %620 = vmatprep.subr.bf16.mxu0 0
  %621 = vmatpush1.bf16.msra.mxu0 %v600
  %622 = vmatprep.subr.bf16.mxu0 0
  %623 = vmatpush1.bf16.msra.mxu0 %v601
  %624 = vmatprep.subr.bf16.mxu0 0
  %625 = vmatpush1.bf16.msra.mxu0 %v602
  %626 = vmatprep.subr.bf16.mxu0 0
  %627 = vmatpush1.bf16.msra.mxu0 %v603
  %628 = vmatprep.subr.bf16.mxu0 0
  %629 = vmatpush1.bf16.msra.mxu0 0
  %630 = vmatprep.subr.bf16.mxu0 0
  %631 = vmatpush1.bf16.msra.mxu0 0
  %632 = vmatprep.subr.bf16.mxu0 0
  %633 = vmatpush1.bf16.msra.mxu0 0
  %634 = vmatprep.subr.bf16.mxu0 0
  %635 = vmatpush1.bf16.msra.mxu0 0
  %636 = vmatprep.subr.bf16.mxu0 0
  %637 = vmatpush1.bf16.msra.mxu0 0
  %638 = vmatprep.subr.bf16.mxu0 0
  %639 = vmatpush1.bf16.msra.mxu0 0
  %640 = vmatprep.subr.bf16.mxu0 0
  %641 = vmatpush1.bf16.msra.mxu0 0
  %642 = vmatprep.subr.bf16.mxu0 0
  %643 = vmatpush1.bf16.msra.mxu0 0
  %644 = vmatprep.mubr.bf16.mxu0 0
  %645 = vmatmul.mubr.bf16.gmra.mrb[0].mxu0 %v379
  %v646 = vpop.f32.mrb[0].mxu0
  %v647 = vadd.f32 %v502, %v646
  %v648 = vpop.f32.mrb[0].mxu0
  %v649 = vpop.f32.mrb[0].mxu0
  %v650 = vadd.f32 %v505, %v649
  %v651 = vpop.f32.mrb[0].mxu0
  %652 = vmatprep.mubr.bf16.mxu0 0
  %653 = vmatmul.mubr.bf16.gmra.mrb[0].mxu0 %v380
  %v654 = vpop.f32.mrb[0].mxu0
  %v655 = vadd.f32 %v510, %v654
  %v656 = vpop.f32.mrb[0].mxu0
  %v657 = vpop.f32.mrb[0].mxu0
  %v658 = vadd.f32 %v513, %v657
  %v659 = vpop.f32.mrb[0].mxu0
  %660 = vmatprep.mubr.bf16.mxu0 0
  %661 = vmatmul.mubr.bf16.gmra.mrb[0].mxu0 %v381
  %v662 = vpop.f32.mrb[0].mxu0
  %v663 = vadd.f32 %v518, %v662
  %v664 = vpop.f32.mrb[0].mxu0
  %v665 = vpop.f32.mrb[0].mxu0
  %v666 = vadd.f32 %v521, %v665
  %v667 = vpop.f32.mrb[0].mxu0
  %668 = vmatprep.mubr.bf16.mxu0 0
  %669 = vmatmul.mubr.bf16.gmra.mrb[0].mxu0 %v382
  %v670 = vpop.f32.mrb[0].mxu0
  %v671 = vadd.f32 %v526, %v670
  %v672 = vpop.f32.mrb[0].mxu0
  %v673 = vpop.f32.mrb[0].mxu0
  %v674 = vadd.f32 %v529, %v673
  %v675 = vpop.f32.mrb[0].mxu0
  %676 = vmatprep.mubr.bf16.mxu0 0
  %677 = vmatmul.mubr.bf16.gmra.mrb[0].mxu0 %v383
  %v678 = vpop.f32.mrb[0].mxu0
  %v679 = vadd.f32 %v534, %v678
  %v680 = vpop.f32.mrb[0].mxu0
  %v681 = vpop.f32.mrb[0].mxu0
  %v682 = vadd.f32 %v537, %v681
  %v683 = vpop.f32.mrb[0].mxu0
  %684 = vmatprep.mubr.bf16.mxu0 0
  %685 = vmatmul.mubr.bf16.gmra.mrb[0].mxu0 %v384
  %v686 = vpop.f32.mrb[0].mxu0
  %v687 = vadd.f32 %v542, %v686
  %v688 = vpop.f32.mrb[0].mxu0
  %v689 = vpop.f32.mrb[0].mxu0
  %v690 = vadd.f32 %v545, %v689
  %v691 = vpop.f32.mrb[0].mxu0
  %692 = vmatprep.mubr.bf16.mxu0 0
  %693 = vmatmul.mubr.bf16.gmra.mrb[0].mxu0 %v385
  %v694 = vpop.f32.mrb[0].mxu0
  %v695 = vadd.f32 %v550, %v694
  %v696 = vpop.f32.mrb[0].mxu0
  %v697 = vpop.f32.mrb[0].mxu0
  %v698 = vadd.f32 %v553, %v697
  %v699 = vpop.f32.mrb[0].mxu0
  %700 = vmatprep.mubr.bf16.mxu0 0
  %701 = vmatmul.mubr.bf16.gmra.mrb[0].mxu0 %v386
  %v702 = vpop.f32.mrb[0].mxu0
  %v703 = vadd.f32 %v558, %v702
  %v704 = vpop.f32.mrb[0].mxu0
  %v705 = vpop.f32.mrb[0].mxu0
  %v706 = vadd.f32 %v561, %v705
  %v707 = vpop.f32.mrb[0].mxu0
  %708 = vdwg.mxu0
  %v709 = vld [vmem:[%s5] sm:$0x1]
  %v711 = vlaneseq
  %v712 = vshrl.u32 %v711, 7
  %v713 = vsub.s32 0, %v712
  %v714 = vrot.slane %v709, %v713
  %v716 = vadd.f32 %v647, %v714
  %v717 = vadd.f32 %v650, %v714
  %v718 = vadd.f32 %v655, %v714
  %v719 = vadd.f32 %v658, %v714
  %v720 = vadd.f32 %v663, %v714
  %v721 = vadd.f32 %v666, %v714
  %v722 = vadd.f32 %v671, %v714
  %v723 = vadd.f32 %v674, %v714
  %v724 = vadd.f32 %v679, %v714
  %v725 = vadd.f32 %v682, %v714
  %v726 = vadd.f32 %v687, %v714
  %v727 = vadd.f32 %v690, %v714
  %v728 = vadd.f32 %v695, %v714
  %v729 = vadd.f32 %v698, %v714
  %v730 = vadd.f32 %v703, %v714
  %v731 = vadd.f32 %v706, %v714
  %v732 = vmax.f32 %v716, 0.0
  %v733 = vmax.f32 %v717, 0.0
  %v734 = vmax.f32 %v718, 0.0
  %v735 = vmax.f32 %v719, 0.0
  %v736 = vmax.f32 %v720, 0.0
  %v737 = vmax.f32 %v721, 0.0
  %v738 = vmax.f32 %v722, 0.0
  %v739 = vmax.f32 %v723, 0.0
  %v740 = vmax.f32 %v724, 0.0
  %v741 = vmax.f32 %v725, 0.0
  %v742 = vmax.f32 %v726, 0.0
  %v743 = vmax.f32 %v727, 0.0
  %v744 = vmax.f32 %v728, 0.0
  %v745 = vmax.f32 %v729, 0.0
  %v746 = vmax.f32 %v730, 0.0
  %v747 = vmax.f32 %v731, 0.0
  %v748 = vpack.c.bf16 %v733, %v732
  %v749 = vpack.c.bf16 %v735, %v734
  %v750 = vpack.c.bf16 %v737, %v736
  %v751 = vpack.c.bf16 %v739, %v738
  %v752 = vpack.c.bf16 %v741, %v740
  %v753 = vpack.c.bf16 %v743, %v742
  %v754 = vpack.c.bf16 %v745, %v744
  %v755 = vpack.c.bf16 %v747, %v746
  %756 = vmatprep.subr.bf16.mxu0 0
  %757 = vmatpush1.bf16.msra.mxu0 %v748
  %758 = vmatprep.subr.bf16.mxu0 0
  %759 = vmatpush1.bf16.msra.mxu0 %v749
  %760 = vmatprep.subr.bf16.mxu0 0
  %761 = vmatpush1.bf16.msra.mxu0 %v750
  %762 = vmatprep.subr.bf16.mxu0 0
  %763 = vmatpush1.bf16.msra.mxu0 %v751
  %764 = vmatprep.subr.bf16.mxu0 0
  %765 = vmatpush1.bf16.msra.mxu0 %v752
  %766 = vmatprep.subr.bf16.mxu0 0
  %767 = vmatpush1.bf16.msra.mxu0 %v753
  %768 = vmatprep.subr.bf16.mxu0 0
  %769 = vmatpush1.bf16.msra.mxu0 %v754
  %770 = vmatprep.subr.bf16.mxu0 0
  %771 = vmatpush1.bf16.msra.mxu0 %v755
  %772 = vmatprep.subr.bf16.mxu0 0
  %773 = vmatpush1.bf16.msra.mxu0 0
  %774 = vmatprep.subr.bf16.mxu0 0
  %775 = vmatpush1.bf16.msra.mxu0 0
  %776 = vmatprep.subr.bf16.mxu0 0
  %777 = vmatpush1.bf16.msra.mxu0 0
  %778 = vmatprep.subr.bf16.mxu0 0
  %779 = vmatpush1.bf16.msra.mxu0 0
  %780 = vmatprep.subr.bf16.mxu0 0
  %781 = vmatpush1.bf16.msra.mxu0 0
  %782 = vmatprep.subr.bf16.mxu0 0
  %783 = vmatpush1.bf16.msra.mxu0 0
  %784 = vmatprep.subr.bf16.mxu0 0
  %785 = vmatpush1.bf16.msra.mxu0 0
  %786 = vmatprep.subr.bf16.mxu0 0
  %787 = vmatpush1.bf16.msra.mxu0 0
  %788 = vmatprep.mubr.bf16.mxu0 0
  %789 = vmatmul.mubr.bf16.gmra.mrb[0].mxu0 %v122
  %v790 = vpop.f32.mrb[0].mxu0
  %v791 = vadd.f32 0.0, %v790
  %v792 = vpop.f32.mrb[0].mxu0
  %v793 = vpop.f32.mrb[0].mxu0
  %v794 = vadd.f32 0.0, %v793
  %v795 = vpop.f32.mrb[0].mxu0
  %796 = vmatprep.mubr.bf16.mxu0 0
  %797 = vmatmul.mubr.bf16.gmra.mrb[0].mxu0 %v123
  %v798 = vpop.f32.mrb[0].mxu0
  %v799 = vadd.f32 0.0, %v798
  %v800 = vpop.f32.mrb[0].mxu0
  %v801 = vpop.f32.mrb[0].mxu0
  %v802 = vadd.f32 0.0, %v801
  %v803 = vpop.f32.mrb[0].mxu0
  %804 = vmatprep.mubr.bf16.mxu0 0
  %805 = vmatmul.mubr.bf16.gmra.mrb[0].mxu0 %v124
  %v806 = vpop.f32.mrb[0].mxu0
  %v807 = vadd.f32 0.0, %v806
  %v808 = vpop.f32.mrb[0].mxu0
  %v809 = vpop.f32.mrb[0].mxu0
  %v810 = vadd.f32 0.0, %v809
  %v811 = vpop.f32.mrb[0].mxu0
  %812 = vmatprep.mubr.bf16.mxu0 0
  %813 = vmatmul.mubr.bf16.gmra.mrb[0].mxu0 %v125
  %v814 = vpop.f32.mrb[0].mxu0
  %v815 = vadd.f32 0.0, %v814
  %v816 = vpop.f32.mrb[0].mxu0
  %v817 = vpop.f32.mrb[0].mxu0
  %v818 = vadd.f32 0.0, %v817
  %v819 = vpop.f32.mrb[0].mxu0
  %820 = vmatprep.mubr.bf16.mxu0 0
  %821 = vmatmul.mubr.bf16.gmra.mrb[0].mxu0 %v126
  %v822 = vpop.f32.mrb[0].mxu0
  %v823 = vadd.f32 0.0, %v822
  %v824 = vpop.f32.mrb[0].mxu0
  %v825 = vpop.f32.mrb[0].mxu0
  %v826 = vadd.f32 0.0, %v825
  %v827 = vpop.f32.mrb[0].mxu0
  %828 = vmatprep.mubr.bf16.mxu0 0
  %829 = vmatmul.mubr.bf16.gmra.mrb[0].mxu0 %v127
  %v830 = vpop.f32.mrb[0].mxu0
  %v831 = vadd.f32 0.0, %v830
  %v832 = vpop.f32.mrb[0].mxu0
  %v833 = vpop.f32.mrb[0].mxu0
  %v834 = vadd.f32 0.0, %v833
  %v835 = vpop.f32.mrb[0].mxu0
  %836 = vmatprep.mubr.bf16.mxu0 0
  %837 = vmatmul.mubr.bf16.gmra.mrb[0].mxu0 %v128
  %v838 = vpop.f32.mrb[0].mxu0
  %v839 = vadd.f32 0.0, %v838
  %v840 = vpop.f32.mrb[0].mxu0
  %v841 = vpop.f32.mrb[0].mxu0
  %v842 = vadd.f32 0.0, %v841
  %v843 = vpop.f32.mrb[0].mxu0
  %844 = vmatprep.mubr.bf16.mxu0 0
  %845 = vmatmul.mubr.bf16.gmra.mrb[0].mxu0 %v129
  %v846 = vpop.f32.mrb[0].mxu0
  %v847 = vadd.f32 0.0, %v846
  %v848 = vpop.f32.mrb[0].mxu0
  %v849 = vpop.f32.mrb[0].mxu0
  %v850 = vadd.f32 0.0, %v849
  %v851 = vpop.f32.mrb[0].mxu0
  %852 = vdwg.mxu0
  %v853 = vmul.f32 %v791, %v286
  %v854 = vmul.f32 %v794, %v291
  %v855 = vmul.f32 %v799, %v296
  %v856 = vmul.f32 %v802, %v301
  %v857 = vmul.f32 %v807, %v306
  %v858 = vmul.f32 %v810, %v311
  %v859 = vmul.f32 %v815, %v316
  %v860 = vmul.f32 %v818, %v321
  %v861 = vmul.f32 %v823, %v326
  %v862 = vmul.f32 %v826, %v331
  %v863 = vmul.f32 %v831, %v336
  %v864 = vmul.f32 %v834, %v341
  %v865 = vmul.f32 %v839, %v346
  %v866 = vmul.f32 %v842, %v351
  %v867 = vmul.f32 %v847, %v356
  %v868 = vmul.f32 %v850, %v361
  %v869 = vpack.c.bf16 %v854, %v853
  %v870 = vpack.c.bf16 %v856, %v855
  %v871 = vpack.c.bf16 %v858, %v857
  %v872 = vpack.c.bf16 %v860, %v859
  %v873 = vpack.c.bf16 %v862, %v861
  %v874 = vpack.c.bf16 %v864, %v863
  %v875 = vpack.c.bf16 %v866, %v865
  %v876 = vpack.c.bf16 %v868, %v867
  %v877 = vld [vmem:[%s6] sm:$0xf]
  %v878 = vld [vmem:[%s6 + $0x4] sm:$0xf]
  %v879 = vld [vmem:[%s6 + $0x8] sm:$0xf]
  %v880 = vld [vmem:[%s6 + $0xc] sm:$0xf]
  %v881 = vld [vmem:[%s6 + $0x10] sm:$0xf]
  %v882 = vld [vmem:[%s6 + $0x14] sm:$0xf]
  %v883 = vld [vmem:[%s6 + $0x18] sm:$0xf]
  %v884 = vld [vmem:[%s6 + $0x1c] sm:$0xf]
  %v885 = vld [vmem:[%s6 + $0x20] sm:$0xf]
  %v886 = vld [vmem:[%s6 + $0x24] sm:$0xf]
  %v887 = vld [vmem:[%s6 + $0x28] sm:$0xf]
  %v888 = vld [vmem:[%s6 + $0x2c] sm:$0xf]
  %v889 = vld [vmem:[%s6 + $0x30] sm:$0xf]
  %v890 = vld [vmem:[%s6 + $0x34] sm:$0xf]
  %v891 = vld [vmem:[%s6 + $0x38] sm:$0xf]
  %v892 = vld [vmem:[%s6 + $0x3c] sm:$0xf]
  %v893 = vld [vmem:[%s7] sm:$0xf]
  %v894 = vld [vmem:[%s7 + $0x4] sm:$0xf]
  %v895 = vld [vmem:[%s7 + $0x8] sm:$0xf]
  %v896 = vld [vmem:[%s7 + $0xc] sm:$0xf]
  %v897 = vld [vmem:[%s7 + $0x10] sm:$0xf]
  %v898 = vld [vmem:[%s7 + $0x14] sm:$0xf]
  %v899 = vld [vmem:[%s7 + $0x18] sm:$0xf]
  %v900 = vld [vmem:[%s7 + $0x1c] sm:$0xf]
  %v901 = vld [vmem:[%s7 + $0x20] sm:$0xf]
  %v902 = vld [vmem:[%s7 + $0x24] sm:$0xf]
  %v903 = vld [vmem:[%s7 + $0x28] sm:$0xf]
  %v904 = vld [vmem:[%s7 + $0x2c] sm:$0xf]
  %v905 = vld [vmem:[%s7 + $0x30] sm:$0xf]
  %v906 = vld [vmem:[%s7 + $0x34] sm:$0xf]
  %v907 = vld [vmem:[%s7 + $0x38] sm:$0xf]
  %v908 = vld [vmem:[%s7 + $0x3c] sm:$0xf]
  %v925 = vunpack.c.l.b16 %v893
  %v926 = vunpack.c.l.b16 %v894
  %v927 = vunpack.c.l.b16 %v895
  %v928 = vunpack.c.l.b16 %v896
  %v929 = vunpack.c.l.b16 %v897
  %v930 = vunpack.c.l.b16 %v898
  %v931 = vunpack.c.l.b16 %v899
  %v932 = vunpack.c.l.b16 %v900
  %v933 = vunpack.c.l.b16 %v901
  %v934 = vunpack.c.l.b16 %v902
  %v935 = vunpack.c.l.b16 %v903
  %v936 = vunpack.c.l.b16 %v904
  %v937 = vunpack.c.l.b16 %v905
  %v938 = vunpack.c.l.b16 %v906
  %v939 = vunpack.c.l.b16 %v907
  %v940 = vunpack.c.l.b16 %v908
  %v941 = vpack.c.b16 %v926, %v925
  %v942 = vpack.c.b16 %v928, %v927
  %v943 = vpack.c.b16 %v930, %v929
  %v944 = vpack.c.b16 %v932, %v931
  %v945 = vpack.c.b16 %v934, %v933
  %v946 = vpack.c.b16 %v936, %v935
  %v947 = vpack.c.b16 %v938, %v937
  %v948 = vpack.c.b16 %v940, %v939
  %957 = vmatprep.subr.bf16.mxu0 0
  %958 = vmatpush1.bf16.msra.mxu0 %v941
  %959 = vmatprep.subr.bf16.mxu0 0
  %960 = vmatpush1.bf16.msra.mxu0 %v942
  %961 = vmatprep.subr.bf16.mxu0 0
  %962 = vmatpush1.bf16.msra.mxu0 %v943
  %963 = vmatprep.subr.bf16.mxu0 0
  %964 = vmatpush1.bf16.msra.mxu0 %v944
  %965 = vmatprep.subr.bf16.mxu0 0
  %966 = vmatpush1.bf16.msra.mxu0 %v945
  %967 = vmatprep.subr.bf16.mxu0 0
  %968 = vmatpush1.bf16.msra.mxu0 %v946
  %969 = vmatprep.subr.bf16.mxu0 0
  %970 = vmatpush1.bf16.msra.mxu0 %v947
  %971 = vmatprep.subr.bf16.mxu0 0
  %972 = vmatpush1.bf16.msra.mxu0 %v948
  %973 = vmatprep.subr.bf16.mxu0 0
  %974 = vmatpush1.bf16.msra.mxu0 0
  %975 = vmatprep.subr.bf16.mxu0 0
  %976 = vmatpush1.bf16.msra.mxu0 0
  %977 = vmatprep.subr.bf16.mxu0 0
  %978 = vmatpush1.bf16.msra.mxu0 0
  %979 = vmatprep.subr.bf16.mxu0 0
  %980 = vmatpush1.bf16.msra.mxu0 0
  %981 = vmatprep.subr.bf16.mxu0 0
  %982 = vmatpush1.bf16.msra.mxu0 0
  %983 = vmatprep.subr.bf16.mxu0 0
  %984 = vmatpush1.bf16.msra.mxu0 0
  %985 = vmatprep.subr.bf16.mxu0 0
  %986 = vmatpush1.bf16.msra.mxu0 0
  %987 = vmatprep.subr.bf16.mxu0 0
  %988 = vmatpush1.bf16.msra.mxu0 0
  %989 = vmatprep.mubr.bf16.mxu0 0
  %990 = vmatmul.mubr.bf16.gmra.mrb[0].mxu0 %v748
  %v991 = vpop.f32.mrb[0].mxu0
  %v992 = vadd.f32 0.0, %v991
  %v993 = vpop.f32.mrb[0].mxu0
  %v994 = vpop.f32.mrb[0].mxu0
  %v995 = vadd.f32 0.0, %v994
  %v996 = vpop.f32.mrb[0].mxu0
  %997 = vmatprep.mubr.bf16.mxu0 0
  %998 = vmatmul.mubr.bf16.gmra.mrb[0].mxu0 %v749
  %v999 = vpop.f32.mrb[0].mxu0
  %v1000 = vadd.f32 0.0, %v999
  %v1001 = vpop.f32.mrb[0].mxu0
  %v1002 = vpop.f32.mrb[0].mxu0
  %v1003 = vadd.f32 0.0, %v1002
  %v1004 = vpop.f32.mrb[0].mxu0
  %1005 = vmatprep.mubr.bf16.mxu0 0
  %1006 = vmatmul.mubr.bf16.gmra.mrb[0].mxu0 %v750
  %v1007 = vpop.f32.mrb[0].mxu0
  %v1008 = vadd.f32 0.0, %v1007
  %v1009 = vpop.f32.mrb[0].mxu0
  %v1010 = vpop.f32.mrb[0].mxu0
  %v1011 = vadd.f32 0.0, %v1010
  %v1012 = vpop.f32.mrb[0].mxu0
  %1013 = vmatprep.mubr.bf16.mxu0 0
  %1014 = vmatmul.mubr.bf16.gmra.mrb[0].mxu0 %v751
  %v1015 = vpop.f32.mrb[0].mxu0
  %v1016 = vadd.f32 0.0, %v1015
  %v1017 = vpop.f32.mrb[0].mxu0
  %v1018 = vpop.f32.mrb[0].mxu0
  %v1019 = vadd.f32 0.0, %v1018
  %v1020 = vpop.f32.mrb[0].mxu0
  %1021 = vmatprep.mubr.bf16.mxu0 0
  %1022 = vmatmul.mubr.bf16.gmra.mrb[0].mxu0 %v752
  %v1023 = vpop.f32.mrb[0].mxu0
  %v1024 = vadd.f32 0.0, %v1023
  %v1025 = vpop.f32.mrb[0].mxu0
  %v1026 = vpop.f32.mrb[0].mxu0
  %v1027 = vadd.f32 0.0, %v1026
  %v1028 = vpop.f32.mrb[0].mxu0
  %1029 = vmatprep.mubr.bf16.mxu0 0
  %1030 = vmatmul.mubr.bf16.gmra.mrb[0].mxu0 %v753
  %v1031 = vpop.f32.mrb[0].mxu0
  %v1032 = vadd.f32 0.0, %v1031
  %v1033 = vpop.f32.mrb[0].mxu0
  %v1034 = vpop.f32.mrb[0].mxu0
  %v1035 = vadd.f32 0.0, %v1034
  %v1036 = vpop.f32.mrb[0].mxu0
  %1037 = vmatprep.mubr.bf16.mxu0 0
  %1038 = vmatmul.mubr.bf16.gmra.mrb[0].mxu0 %v754
  %v1039 = vpop.f32.mrb[0].mxu0
  %v1040 = vadd.f32 0.0, %v1039
  %v1041 = vpop.f32.mrb[0].mxu0
  %v1042 = vpop.f32.mrb[0].mxu0
  %v1043 = vadd.f32 0.0, %v1042
  %v1044 = vpop.f32.mrb[0].mxu0
  %1045 = vmatprep.mubr.bf16.mxu0 0
  %1046 = vmatmul.mubr.bf16.gmra.mrb[0].mxu0 %v755
  %v1047 = vpop.f32.mrb[0].mxu0
  %v1048 = vadd.f32 0.0, %v1047
  %v1049 = vpop.f32.mrb[0].mxu0
  %v1050 = vpop.f32.mrb[0].mxu0
  %v1051 = vadd.f32 0.0, %v1050
  %v1052 = vpop.f32.mrb[0].mxu0
  %1053 = vdwg.mxu0
  %v1070 = vunpack.c.l.b16 %v877
  %v1071 = vunpack.c.l.b16 %v878
  %v1072 = vunpack.c.l.b16 %v879
  %v1073 = vunpack.c.l.b16 %v880
  %v1074 = vunpack.c.l.b16 %v881
  %v1075 = vunpack.c.l.b16 %v882
  %v1076 = vunpack.c.l.b16 %v883
  %v1077 = vunpack.c.l.b16 %v884
  %v1078 = vunpack.c.l.b16 %v885
  %v1079 = vunpack.c.l.b16 %v886
  %v1080 = vunpack.c.l.b16 %v887
  %v1081 = vunpack.c.l.b16 %v888
  %v1082 = vunpack.c.l.b16 %v889
  %v1083 = vunpack.c.l.b16 %v890
  %v1084 = vunpack.c.l.b16 %v891
  %v1085 = vunpack.c.l.b16 %v892
  %v1086 = vpack.c.b16 %v1071, %v1070
  %v1087 = vpack.c.b16 %v1073, %v1072
  %v1088 = vpack.c.b16 %v1075, %v1074
  %v1089 = vpack.c.b16 %v1077, %v1076
  %v1090 = vpack.c.b16 %v1079, %v1078
  %v1091 = vpack.c.b16 %v1081, %v1080
  %v1092 = vpack.c.b16 %v1083, %v1082
  %v1093 = vpack.c.b16 %v1085, %v1084
  %1102 = vmatprep.subr.bf16.mxu0 0
  %1103 = vmatpush1.bf16.msra.mxu0 %v1086
  %1104 = vmatprep.subr.bf16.mxu0 0
  %1105 = vmatpush1.bf16.msra.mxu0 %v1087
  %1106 = vmatprep.subr.bf16.mxu0 0
  %1107 = vmatpush1.bf16.msra.mxu0 %v1088
  %1108 = vmatprep.subr.bf16.mxu0 0
  %1109 = vmatpush1.bf16.msra.mxu0 %v1089
  %1110 = vmatprep.subr.bf16.mxu0 0
  %1111 = vmatpush1.bf16.msra.mxu0 %v1090
  %1112 = vmatprep.subr.bf16.mxu0 0
  %1113 = vmatpush1.bf16.msra.mxu0 %v1091
  %1114 = vmatprep.subr.bf16.mxu0 0
  %1115 = vmatpush1.bf16.msra.mxu0 %v1092
  %1116 = vmatprep.subr.bf16.mxu0 0
  %1117 = vmatpush1.bf16.msra.mxu0 %v1093
  %1118 = vmatprep.subr.bf16.mxu0 0
  %1119 = vmatpush1.bf16.msra.mxu0 0
  %1120 = vmatprep.subr.bf16.mxu0 0
  %1121 = vmatpush1.bf16.msra.mxu0 0
  %1122 = vmatprep.subr.bf16.mxu0 0
  %1123 = vmatpush1.bf16.msra.mxu0 0
  %1124 = vmatprep.subr.bf16.mxu0 0
  %1125 = vmatpush1.bf16.msra.mxu0 0
  %1126 = vmatprep.subr.bf16.mxu0 0
  %1127 = vmatpush1.bf16.msra.mxu0 0
  %1128 = vmatprep.subr.bf16.mxu0 0
  %1129 = vmatpush1.bf16.msra.mxu0 0
  %1130 = vmatprep.subr.bf16.mxu0 0
  %1131 = vmatpush1.bf16.msra.mxu0 0
  %1132 = vmatprep.subr.bf16.mxu0 0
  %1133 = vmatpush1.bf16.msra.mxu0 0
  %1134 = vmatprep.mubr.bf16.mxu0 0
  %1135 = vmatmul.mubr.bf16.gmra.mrb[0].mxu0 %v869
  %v1136 = vpop.f32.mrb[0].mxu0
  %v1137 = vadd.f32 %v992, %v1136
  %v1138 = vpop.f32.mrb[0].mxu0
  %v1139 = vpop.f32.mrb[0].mxu0
  %v1140 = vadd.f32 %v995, %v1139
  %v1141 = vpop.f32.mrb[0].mxu0
  %1142 = vmatprep.mubr.bf16.mxu0 0
  %1143 = vmatmul.mubr.bf16.gmra.mrb[0].mxu0 %v870
  %v1144 = vpop.f32.mrb[0].mxu0
  %v1145 = vadd.f32 %v1000, %v1144
  %v1146 = vpop.f32.mrb[0].mxu0
  %v1147 = vpop.f32.mrb[0].mxu0
  %v1148 = vadd.f32 %v1003, %v1147
  %v1149 = vpop.f32.mrb[0].mxu0
  %1150 = vmatprep.mubr.bf16.mxu0 0
  %1151 = vmatmul.mubr.bf16.gmra.mrb[0].mxu0 %v871
  %v1152 = vpop.f32.mrb[0].mxu0
  %v1153 = vadd.f32 %v1008, %v1152
  %v1154 = vpop.f32.mrb[0].mxu0
  %v1155 = vpop.f32.mrb[0].mxu0
  %v1156 = vadd.f32 %v1011, %v1155
  %v1157 = vpop.f32.mrb[0].mxu0
  %1158 = vmatprep.mubr.bf16.mxu0 0
  %1159 = vmatmul.mubr.bf16.gmra.mrb[0].mxu0 %v872
  %v1160 = vpop.f32.mrb[0].mxu0
  %v1161 = vadd.f32 %v1016, %v1160
  %v1162 = vpop.f32.mrb[0].mxu0
  %v1163 = vpop.f32.mrb[0].mxu0
  %v1164 = vadd.f32 %v1019, %v1163
  %v1165 = vpop.f32.mrb[0].mxu0
  %1166 = vmatprep.mubr.bf16.mxu0 0
  %1167 = vmatmul.mubr.bf16.gmra.mrb[0].mxu0 %v873
  %v1168 = vpop.f32.mrb[0].mxu0
  %v1169 = vadd.f32 %v1024, %v1168
  %v1170 = vpop.f32.mrb[0].mxu0
  %v1171 = vpop.f32.mrb[0].mxu0
  %v1172 = vadd.f32 %v1027, %v1171
  %v1173 = vpop.f32.mrb[0].mxu0
  %1174 = vmatprep.mubr.bf16.mxu0 0
  %1175 = vmatmul.mubr.bf16.gmra.mrb[0].mxu0 %v874
  %v1176 = vpop.f32.mrb[0].mxu0
  %v1177 = vadd.f32 %v1032, %v1176
  %v1178 = vpop.f32.mrb[0].mxu0
  %v1179 = vpop.f32.mrb[0].mxu0
  %v1180 = vadd.f32 %v1035, %v1179
  %v1181 = vpop.f32.mrb[0].mxu0
  %1182 = vmatprep.mubr.bf16.mxu0 0
  %1183 = vmatmul.mubr.bf16.gmra.mrb[0].mxu0 %v875
  %v1184 = vpop.f32.mrb[0].mxu0
  %v1185 = vadd.f32 %v1040, %v1184
  %v1186 = vpop.f32.mrb[0].mxu0
  %v1187 = vpop.f32.mrb[0].mxu0
  %v1188 = vadd.f32 %v1043, %v1187
  %v1189 = vpop.f32.mrb[0].mxu0
  %1190 = vmatprep.mubr.bf16.mxu0 0
  %1191 = vmatmul.mubr.bf16.gmra.mrb[0].mxu0 %v876
  %v1192 = vpop.f32.mrb[0].mxu0
  %v1193 = vadd.f32 %v1048, %v1192
  %v1194 = vpop.f32.mrb[0].mxu0
  %v1195 = vpop.f32.mrb[0].mxu0
  %v1196 = vadd.f32 %v1051, %v1195
  %v1197 = vpop.f32.mrb[0].mxu0
  %1198 = vdwg.mxu0
  %v1199 = vld [vmem:[%s8] sm:$0x1]
  %v1201 = vlaneseq
  %v1202 = vshrl.u32 %v1201, 7
  %v1203 = vsub.s32 0, %v1202
  %v1204 = vrot.slane %v1199, %v1203
  %v1206 = vadd.f32 %v1137, %v1204
  %v1207 = vadd.f32 %v1140, %v1204
  %v1208 = vadd.f32 %v1145, %v1204
  %v1209 = vadd.f32 %v1148, %v1204
  %v1210 = vadd.f32 %v1153, %v1204
  %v1211 = vadd.f32 %v1156, %v1204
  %v1212 = vadd.f32 %v1161, %v1204
  %v1213 = vadd.f32 %v1164, %v1204
  %v1214 = vadd.f32 %v1169, %v1204
  %v1215 = vadd.f32 %v1172, %v1204
  %v1216 = vadd.f32 %v1177, %v1204
  %v1217 = vadd.f32 %v1180, %v1204
  %v1218 = vadd.f32 %v1185, %v1204
  %v1219 = vadd.f32 %v1188, %v1204
  %v1220 = vadd.f32 %v1193, %v1204
  %v1221 = vadd.f32 %v1196, %v1204
  %v1222 = vmax.f32 %v1206, 0.0
  %v1223 = vmax.f32 %v1207, 0.0
  %v1224 = vmax.f32 %v1208, 0.0
  %v1225 = vmax.f32 %v1209, 0.0
  %v1226 = vmax.f32 %v1210, 0.0
  %v1227 = vmax.f32 %v1211, 0.0
  %v1228 = vmax.f32 %v1212, 0.0
  %v1229 = vmax.f32 %v1213, 0.0
  %v1230 = vmax.f32 %v1214, 0.0
  %v1231 = vmax.f32 %v1215, 0.0
  %v1232 = vmax.f32 %v1216, 0.0
  %v1233 = vmax.f32 %v1217, 0.0
  %v1234 = vmax.f32 %v1218, 0.0
  %v1235 = vmax.f32 %v1219, 0.0
  %v1236 = vmax.f32 %v1220, 0.0
  %v1237 = vmax.f32 %v1221, 0.0
  %v1238 = vpack.c.bf16 %v1223, %v1222
  %v1239 = vpack.c.bf16 %v1225, %v1224
  %v1240 = vpack.c.bf16 %v1227, %v1226
  %v1241 = vpack.c.bf16 %v1229, %v1228
  %v1242 = vpack.c.bf16 %v1231, %v1230
  %v1243 = vpack.c.bf16 %v1233, %v1232
  %v1244 = vpack.c.bf16 %v1235, %v1234
  %v1245 = vpack.c.bf16 %v1237, %v1236
  %1246 = vmatprep.subr.bf16.mxu0 0
  %1247 = vmatpush1.bf16.msra.mxu0 %v1238
  %1248 = vmatprep.subr.bf16.mxu0 0
  %1249 = vmatpush1.bf16.msra.mxu0 %v1239
  %1250 = vmatprep.subr.bf16.mxu0 0
  %1251 = vmatpush1.bf16.msra.mxu0 %v1240
  %1252 = vmatprep.subr.bf16.mxu0 0
  %1253 = vmatpush1.bf16.msra.mxu0 %v1241
  %1254 = vmatprep.subr.bf16.mxu0 0
  %1255 = vmatpush1.bf16.msra.mxu0 %v1242
  %1256 = vmatprep.subr.bf16.mxu0 0
  %1257 = vmatpush1.bf16.msra.mxu0 %v1243
  %1258 = vmatprep.subr.bf16.mxu0 0
  %1259 = vmatpush1.bf16.msra.mxu0 %v1244
  %1260 = vmatprep.subr.bf16.mxu0 0
  %1261 = vmatpush1.bf16.msra.mxu0 %v1245
  %1262 = vmatprep.subr.bf16.mxu0 0
  %1263 = vmatpush1.bf16.msra.mxu0 0
  %1264 = vmatprep.subr.bf16.mxu0 0
  %1265 = vmatpush1.bf16.msra.mxu0 0
  %1266 = vmatprep.subr.bf16.mxu0 0
  %1267 = vmatpush1.bf16.msra.mxu0 0
  %1268 = vmatprep.subr.bf16.mxu0 0
  %1269 = vmatpush1.bf16.msra.mxu0 0
  %1270 = vmatprep.subr.bf16.mxu0 0
  %1271 = vmatpush1.bf16.msra.mxu0 0
  %1272 = vmatprep.subr.bf16.mxu0 0
  %1273 = vmatpush1.bf16.msra.mxu0 0
  %1274 = vmatprep.subr.bf16.mxu0 0
  %1275 = vmatpush1.bf16.msra.mxu0 0
  %1276 = vmatprep.subr.bf16.mxu0 0
  %1277 = vmatpush1.bf16.msra.mxu0 0
  %1278 = vmatprep.mubr.bf16.mxu0 0
  %1279 = vmatmul.mubr.bf16.gmra.mrb[0].mxu0 %v122
  %v1280 = vpop.f32.mrb[0].mxu0
  %v1281 = vadd.f32 0.0, %v1280
  %v1282 = vpop.f32.mrb[0].mxu0
  %v1283 = vpop.f32.mrb[0].mxu0
  %v1284 = vadd.f32 0.0, %v1283
  %v1285 = vpop.f32.mrb[0].mxu0
  %1286 = vmatprep.mubr.bf16.mxu0 0
  %1287 = vmatmul.mubr.bf16.gmra.mrb[0].mxu0 %v123
  %v1288 = vpop.f32.mrb[0].mxu0
  %v1289 = vadd.f32 0.0, %v1288
  %v1290 = vpop.f32.mrb[0].mxu0
  %v1291 = vpop.f32.mrb[0].mxu0
  %v1292 = vadd.f32 0.0, %v1291
  %v1293 = vpop.f32.mrb[0].mxu0
  %1294 = vmatprep.mubr.bf16.mxu0 0
  %1295 = vmatmul.mubr.bf16.gmra.mrb[0].mxu0 %v124
  %v1296 = vpop.f32.mrb[0].mxu0
  %v1297 = vadd.f32 0.0, %v1296
  %v1298 = vpop.f32.mrb[0].mxu0
  %v1299 = vpop.f32.mrb[0].mxu0
  %v1300 = vadd.f32 0.0, %v1299
  %v1301 = vpop.f32.mrb[0].mxu0
  %1302 = vmatprep.mubr.bf16.mxu0 0
  %1303 = vmatmul.mubr.bf16.gmra.mrb[0].mxu0 %v125
  %v1304 = vpop.f32.mrb[0].mxu0
  %v1305 = vadd.f32 0.0, %v1304
  %v1306 = vpop.f32.mrb[0].mxu0
  %v1307 = vpop.f32.mrb[0].mxu0
  %v1308 = vadd.f32 0.0, %v1307
  %v1309 = vpop.f32.mrb[0].mxu0
  %1310 = vmatprep.mubr.bf16.mxu0 0
  %1311 = vmatmul.mubr.bf16.gmra.mrb[0].mxu0 %v126
  %v1312 = vpop.f32.mrb[0].mxu0
  %v1313 = vadd.f32 0.0, %v1312
  %v1314 = vpop.f32.mrb[0].mxu0
  %v1315 = vpop.f32.mrb[0].mxu0
  %v1316 = vadd.f32 0.0, %v1315
  %v1317 = vpop.f32.mrb[0].mxu0
  %1318 = vmatprep.mubr.bf16.mxu0 0
  %1319 = vmatmul.mubr.bf16.gmra.mrb[0].mxu0 %v127
  %v1320 = vpop.f32.mrb[0].mxu0
  %v1321 = vadd.f32 0.0, %v1320
  %v1322 = vpop.f32.mrb[0].mxu0
  %v1323 = vpop.f32.mrb[0].mxu0
  %v1324 = vadd.f32 0.0, %v1323
  %v1325 = vpop.f32.mrb[0].mxu0
  %1326 = vmatprep.mubr.bf16.mxu0 0
  %1327 = vmatmul.mubr.bf16.gmra.mrb[0].mxu0 %v128
  %v1328 = vpop.f32.mrb[0].mxu0
  %v1329 = vadd.f32 0.0, %v1328
  %v1330 = vpop.f32.mrb[0].mxu0
  %v1331 = vpop.f32.mrb[0].mxu0
  %v1332 = vadd.f32 0.0, %v1331
  %v1333 = vpop.f32.mrb[0].mxu0
  %1334 = vmatprep.mubr.bf16.mxu0 0
  %1335 = vmatmul.mubr.bf16.gmra.mrb[0].mxu0 %v129
  %v1336 = vpop.f32.mrb[0].mxu0
  %v1337 = vadd.f32 0.0, %v1336
  %v1338 = vpop.f32.mrb[0].mxu0
  %v1339 = vpop.f32.mrb[0].mxu0
  %v1340 = vadd.f32 0.0, %v1339
  %v1341 = vpop.f32.mrb[0].mxu0
  %1342 = vdwg.mxu0
  %v1343 = vmul.f32 %v1281, %v286
  %v1344 = vmul.f32 %v1284, %v291
  %v1345 = vmul.f32 %v1289, %v296
  %v1346 = vmul.f32 %v1292, %v301
  %v1347 = vmul.f32 %v1297, %v306
  %v1348 = vmul.f32 %v1300, %v311
  %v1349 = vmul.f32 %v1305, %v316
  %v1350 = vmul.f32 %v1308, %v321
  %v1351 = vmul.f32 %v1313, %v326
  %v1352 = vmul.f32 %v1316, %v331
  %v1353 = vmul.f32 %v1321, %v336
  %v1354 = vmul.f32 %v1324, %v341
  %v1355 = vmul.f32 %v1329, %v346
  %v1356 = vmul.f32 %v1332, %v351
  %v1357 = vmul.f32 %v1337, %v356
  %v1358 = vmul.f32 %v1340, %v361
  %v1359 = vpack.c.bf16 %v1344, %v1343
  %v1360 = vpack.c.bf16 %v1346, %v1345
  %v1361 = vpack.c.bf16 %v1348, %v1347
  %v1362 = vpack.c.bf16 %v1350, %v1349
  %v1363 = vpack.c.bf16 %v1352, %v1351
  %v1364 = vpack.c.bf16 %v1354, %v1353
  %v1365 = vpack.c.bf16 %v1356, %v1355
  %v1366 = vpack.c.bf16 %v1358, %v1357
  %v1367 = vld [vmem:[%s9] sm:$0xf]
  %v1368 = vld [vmem:[%s9 + $0x4] sm:$0xf]
  %v1369 = vld [vmem:[%s9 + $0x8] sm:$0xf]
  %v1370 = vld [vmem:[%s9 + $0xc] sm:$0xf]
  %v1371 = vld [vmem:[%s9 + $0x10] sm:$0xf]
  %v1372 = vld [vmem:[%s9 + $0x14] sm:$0xf]
  %v1373 = vld [vmem:[%s9 + $0x18] sm:$0xf]
  %v1374 = vld [vmem:[%s9 + $0x1c] sm:$0xf]
  %v1375 = vld [vmem:[%s9 + $0x20] sm:$0xf]
  %v1376 = vld [vmem:[%s9 + $0x24] sm:$0xf]
  %v1377 = vld [vmem:[%s9 + $0x28] sm:$0xf]
  %v1378 = vld [vmem:[%s9 + $0x2c] sm:$0xf]
  %v1379 = vld [vmem:[%s9 + $0x30] sm:$0xf]
  %v1380 = vld [vmem:[%s9 + $0x34] sm:$0xf]
  %v1381 = vld [vmem:[%s9 + $0x38] sm:$0xf]
  %v1382 = vld [vmem:[%s9 + $0x3c] sm:$0xf]
  %v1383 = vld [vmem:[%s10] sm:$0xf]
  %v1384 = vld [vmem:[%s10 + $0x4] sm:$0xf]
  %v1385 = vld [vmem:[%s10 + $0x8] sm:$0xf]
  %v1386 = vld [vmem:[%s10 + $0xc] sm:$0xf]
  %v1387 = vld [vmem:[%s10 + $0x10] sm:$0xf]
  %v1388 = vld [vmem:[%s10 + $0x14] sm:$0xf]
  %v1389 = vld [vmem:[%s10 + $0x18] sm:$0xf]
  %v1390 = vld [vmem:[%s10 + $0x1c] sm:$0xf]
  %v1391 = vld [vmem:[%s10 + $0x20] sm:$0xf]
  %v1392 = vld [vmem:[%s10 + $0x24] sm:$0xf]
  %v1393 = vld [vmem:[%s10 + $0x28] sm:$0xf]
  %v1394 = vld [vmem:[%s10 + $0x2c] sm:$0xf]
  %v1395 = vld [vmem:[%s10 + $0x30] sm:$0xf]
  %v1396 = vld [vmem:[%s10 + $0x34] sm:$0xf]
  %v1397 = vld [vmem:[%s10 + $0x38] sm:$0xf]
  %v1398 = vld [vmem:[%s10 + $0x3c] sm:$0xf]
  %v1415 = vunpack.c.l.b16 %v1383
  %v1416 = vunpack.c.l.b16 %v1384
  %v1417 = vunpack.c.l.b16 %v1385
  %v1418 = vunpack.c.l.b16 %v1386
  %v1419 = vunpack.c.l.b16 %v1387
  %v1420 = vunpack.c.l.b16 %v1388
  %v1421 = vunpack.c.l.b16 %v1389
  %v1422 = vunpack.c.l.b16 %v1390
  %v1423 = vunpack.c.l.b16 %v1391
  %v1424 = vunpack.c.l.b16 %v1392
  %v1425 = vunpack.c.l.b16 %v1393
  %v1426 = vunpack.c.l.b16 %v1394
  %v1427 = vunpack.c.l.b16 %v1395
  %v1428 = vunpack.c.l.b16 %v1396
  %v1429 = vunpack.c.l.b16 %v1397
  %v1430 = vunpack.c.l.b16 %v1398
  %v1431 = vpack.c.b16 %v1416, %v1415
  %v1432 = vpack.c.b16 %v1418, %v1417
  %v1433 = vpack.c.b16 %v1420, %v1419
  %v1434 = vpack.c.b16 %v1422, %v1421
  %v1435 = vpack.c.b16 %v1424, %v1423
  %v1436 = vpack.c.b16 %v1426, %v1425
  %v1437 = vpack.c.b16 %v1428, %v1427
  %v1438 = vpack.c.b16 %v1430, %v1429
  %1447 = vmatprep.subr.bf16.mxu0 0
  %1448 = vmatpush1.bf16.msra.mxu0 %v1431
  %1449 = vmatprep.subr.bf16.mxu0 0
  %1450 = vmatpush1.bf16.msra.mxu0 %v1432
  %1451 = vmatprep.subr.bf16.mxu0 0
  %1452 = vmatpush1.bf16.msra.mxu0 %v1433
  %1453 = vmatprep.subr.bf16.mxu0 0
  %1454 = vmatpush1.bf16.msra.mxu0 %v1434
  %1455 = vmatprep.subr.bf16.mxu0 0
  %1456 = vmatpush1.bf16.msra.mxu0 %v1435
  %1457 = vmatprep.subr.bf16.mxu0 0
  %1458 = vmatpush1.bf16.msra.mxu0 %v1436
  %1459 = vmatprep.subr.bf16.mxu0 0
  %1460 = vmatpush1.bf16.msra.mxu0 %v1437
  %1461 = vmatprep.subr.bf16.mxu0 0
  %1462 = vmatpush1.bf16.msra.mxu0 %v1438
  %1463 = vmatprep.subr.bf16.mxu0 0
  %1464 = vmatpush1.bf16.msra.mxu0 0
  %1465 = vmatprep.subr.bf16.mxu0 0
  %1466 = vmatpush1.bf16.msra.mxu0 0
  %1467 = vmatprep.subr.bf16.mxu0 0
  %1468 = vmatpush1.bf16.msra.mxu0 0
  %1469 = vmatprep.subr.bf16.mxu0 0
  %1470 = vmatpush1.bf16.msra.mxu0 0
  %1471 = vmatprep.subr.bf16.mxu0 0
  %1472 = vmatpush1.bf16.msra.mxu0 0
  %1473 = vmatprep.subr.bf16.mxu0 0
  %1474 = vmatpush1.bf16.msra.mxu0 0
  %1475 = vmatprep.subr.bf16.mxu0 0
  %1476 = vmatpush1.bf16.msra.mxu0 0
  %1477 = vmatprep.subr.bf16.mxu0 0
  %1478 = vmatpush1.bf16.msra.mxu0 0
  %1479 = vmatprep.mubr.bf16.mxu0 0
  %1480 = vmatmul.mubr.bf16.gmra.mrb[0].mxu0 %v1238
  %v1481 = vpop.f32.mrb[0].mxu0
  %v1482 = vadd.f32 0.0, %v1481
  %v1483 = vpop.f32.mrb[0].mxu0
  %v1484 = vpop.f32.mrb[0].mxu0
  %v1485 = vadd.f32 0.0, %v1484
  %v1486 = vpop.f32.mrb[0].mxu0
  %1487 = vmatprep.mubr.bf16.mxu0 0
  %1488 = vmatmul.mubr.bf16.gmra.mrb[0].mxu0 %v1239
  %v1489 = vpop.f32.mrb[0].mxu0
  %v1490 = vadd.f32 0.0, %v1489
  %v1491 = vpop.f32.mrb[0].mxu0
  %v1492 = vpop.f32.mrb[0].mxu0
  %v1493 = vadd.f32 0.0, %v1492
  %v1494 = vpop.f32.mrb[0].mxu0
  %1495 = vmatprep.mubr.bf16.mxu0 0
  %1496 = vmatmul.mubr.bf16.gmra.mrb[0].mxu0 %v1240
  %v1497 = vpop.f32.mrb[0].mxu0
  %v1498 = vadd.f32 0.0, %v1497
  %v1499 = vpop.f32.mrb[0].mxu0
  %v1500 = vpop.f32.mrb[0].mxu0
  %v1501 = vadd.f32 0.0, %v1500
  %v1502 = vpop.f32.mrb[0].mxu0
  %1503 = vmatprep.mubr.bf16.mxu0 0
  %1504 = vmatmul.mubr.bf16.gmra.mrb[0].mxu0 %v1241
  %v1505 = vpop.f32.mrb[0].mxu0
  %v1506 = vadd.f32 0.0, %v1505
  %v1507 = vpop.f32.mrb[0].mxu0
  %v1508 = vpop.f32.mrb[0].mxu0
  %v1509 = vadd.f32 0.0, %v1508
  %v1510 = vpop.f32.mrb[0].mxu0
  %1511 = vmatprep.mubr.bf16.mxu0 0
  %1512 = vmatmul.mubr.bf16.gmra.mrb[0].mxu0 %v1242
  %v1513 = vpop.f32.mrb[0].mxu0
  %v1514 = vadd.f32 0.0, %v1513
  %v1515 = vpop.f32.mrb[0].mxu0
  %v1516 = vpop.f32.mrb[0].mxu0
  %v1517 = vadd.f32 0.0, %v1516
  %v1518 = vpop.f32.mrb[0].mxu0
  %1519 = vmatprep.mubr.bf16.mxu0 0
  %1520 = vmatmul.mubr.bf16.gmra.mrb[0].mxu0 %v1243
  %v1521 = vpop.f32.mrb[0].mxu0
  %v1522 = vadd.f32 0.0, %v1521
  %v1523 = vpop.f32.mrb[0].mxu0
  %v1524 = vpop.f32.mrb[0].mxu0
  %v1525 = vadd.f32 0.0, %v1524
  %v1526 = vpop.f32.mrb[0].mxu0
  %1527 = vmatprep.mubr.bf16.mxu0 0
  %1528 = vmatmul.mubr.bf16.gmra.mrb[0].mxu0 %v1244
  %v1529 = vpop.f32.mrb[0].mxu0
  %v1530 = vadd.f32 0.0, %v1529
  %v1531 = vpop.f32.mrb[0].mxu0
  %v1532 = vpop.f32.mrb[0].mxu0
  %v1533 = vadd.f32 0.0, %v1532
  %v1534 = vpop.f32.mrb[0].mxu0
  %1535 = vmatprep.mubr.bf16.mxu0 0
  %1536 = vmatmul.mubr.bf16.gmra.mrb[0].mxu0 %v1245
  %v1537 = vpop.f32.mrb[0].mxu0
  %v1538 = vadd.f32 0.0, %v1537
  %v1539 = vpop.f32.mrb[0].mxu0
  %v1540 = vpop.f32.mrb[0].mxu0
  %v1541 = vadd.f32 0.0, %v1540
  %v1542 = vpop.f32.mrb[0].mxu0
  %1543 = vdwg.mxu0
  %v1560 = vunpack.c.l.b16 %v1367
  %v1561 = vunpack.c.l.b16 %v1368
  %v1562 = vunpack.c.l.b16 %v1369
  %v1563 = vunpack.c.l.b16 %v1370
  %v1564 = vunpack.c.l.b16 %v1371
  %v1565 = vunpack.c.l.b16 %v1372
  %v1566 = vunpack.c.l.b16 %v1373
  %v1567 = vunpack.c.l.b16 %v1374
  %v1568 = vunpack.c.l.b16 %v1375
  %v1569 = vunpack.c.l.b16 %v1376
  %v1570 = vunpack.c.l.b16 %v1377
  %v1571 = vunpack.c.l.b16 %v1378
  %v1572 = vunpack.c.l.b16 %v1379
  %v1573 = vunpack.c.l.b16 %v1380
  %v1574 = vunpack.c.l.b16 %v1381
  %v1575 = vunpack.c.l.b16 %v1382
  %v1576 = vpack.c.b16 %v1561, %v1560
  %v1577 = vpack.c.b16 %v1563, %v1562
  %v1578 = vpack.c.b16 %v1565, %v1564
  %v1579 = vpack.c.b16 %v1567, %v1566
  %v1580 = vpack.c.b16 %v1569, %v1568
  %v1581 = vpack.c.b16 %v1571, %v1570
  %v1582 = vpack.c.b16 %v1573, %v1572
  %v1583 = vpack.c.b16 %v1575, %v1574
  %1592 = vmatprep.subr.bf16.mxu0 0
  %1593 = vmatpush1.bf16.msra.mxu0 %v1576
  %1594 = vmatprep.subr.bf16.mxu0 0
  %1595 = vmatpush1.bf16.msra.mxu0 %v1577
  %1596 = vmatprep.subr.bf16.mxu0 0
  %1597 = vmatpush1.bf16.msra.mxu0 %v1578
  %1598 = vmatprep.subr.bf16.mxu0 0
  %1599 = vmatpush1.bf16.msra.mxu0 %v1579
  %1600 = vmatprep.subr.bf16.mxu0 0
  %1601 = vmatpush1.bf16.msra.mxu0 %v1580
  %1602 = vmatprep.subr.bf16.mxu0 0
  %1603 = vmatpush1.bf16.msra.mxu0 %v1581
  %1604 = vmatprep.subr.bf16.mxu0 0
  %1605 = vmatpush1.bf16.msra.mxu0 %v1582
  %1606 = vmatprep.subr.bf16.mxu0 0
  %1607 = vmatpush1.bf16.msra.mxu0 %v1583
  %1608 = vmatprep.subr.bf16.mxu0 0
  %1609 = vmatpush1.bf16.msra.mxu0 0
  %1610 = vmatprep.subr.bf16.mxu0 0
  %1611 = vmatpush1.bf16.msra.mxu0 0
  %1612 = vmatprep.subr.bf16.mxu0 0
  %1613 = vmatpush1.bf16.msra.mxu0 0
  %1614 = vmatprep.subr.bf16.mxu0 0
  %1615 = vmatpush1.bf16.msra.mxu0 0
  %1616 = vmatprep.subr.bf16.mxu0 0
  %1617 = vmatpush1.bf16.msra.mxu0 0
  %1618 = vmatprep.subr.bf16.mxu0 0
  %1619 = vmatpush1.bf16.msra.mxu0 0
  %1620 = vmatprep.subr.bf16.mxu0 0
  %1621 = vmatpush1.bf16.msra.mxu0 0
  %1622 = vmatprep.subr.bf16.mxu0 0
  %1623 = vmatpush1.bf16.msra.mxu0 0
  %1624 = vmatprep.mubr.bf16.mxu0 0
  %1625 = vmatmul.mubr.bf16.gmra.mrb[0].mxu0 %v1359
  %v1626 = vpop.f32.mrb[0].mxu0
  %v1627 = vadd.f32 %v1482, %v1626
  %v1628 = vpop.f32.mrb[0].mxu0
  %v1629 = vpop.f32.mrb[0].mxu0
  %v1630 = vadd.f32 %v1485, %v1629
  %v1631 = vpop.f32.mrb[0].mxu0
  %1632 = vmatprep.mubr.bf16.mxu0 0
  %1633 = vmatmul.mubr.bf16.gmra.mrb[0].mxu0 %v1360
  %v1634 = vpop.f32.mrb[0].mxu0
  %v1635 = vadd.f32 %v1490, %v1634
  %v1636 = vpop.f32.mrb[0].mxu0
  %v1637 = vpop.f32.mrb[0].mxu0
  %v1638 = vadd.f32 %v1493, %v1637
  %v1639 = vpop.f32.mrb[0].mxu0
  %1640 = vmatprep.mubr.bf16.mxu0 0
  %1641 = vmatmul.mubr.bf16.gmra.mrb[0].mxu0 %v1361
  %v1642 = vpop.f32.mrb[0].mxu0
  %v1643 = vadd.f32 %v1498, %v1642
  %v1644 = vpop.f32.mrb[0].mxu0
  %v1645 = vpop.f32.mrb[0].mxu0
  %v1646 = vadd.f32 %v1501, %v1645
  %v1647 = vpop.f32.mrb[0].mxu0
  %1648 = vmatprep.mubr.bf16.mxu0 0
  %1649 = vmatmul.mubr.bf16.gmra.mrb[0].mxu0 %v1362
  %v1650 = vpop.f32.mrb[0].mxu0
  %v1651 = vadd.f32 %v1506, %v1650
  %v1652 = vpop.f32.mrb[0].mxu0
  %v1653 = vpop.f32.mrb[0].mxu0
  %v1654 = vadd.f32 %v1509, %v1653
  %v1655 = vpop.f32.mrb[0].mxu0
  %1656 = vmatprep.mubr.bf16.mxu0 0
  %1657 = vmatmul.mubr.bf16.gmra.mrb[0].mxu0 %v1363
  %v1658 = vpop.f32.mrb[0].mxu0
  %v1659 = vadd.f32 %v1514, %v1658
  %v1660 = vpop.f32.mrb[0].mxu0
  %v1661 = vpop.f32.mrb[0].mxu0
  %v1662 = vadd.f32 %v1517, %v1661
  %v1663 = vpop.f32.mrb[0].mxu0
  %1664 = vmatprep.mubr.bf16.mxu0 0
  %1665 = vmatmul.mubr.bf16.gmra.mrb[0].mxu0 %v1364
  %v1666 = vpop.f32.mrb[0].mxu0
  %v1667 = vadd.f32 %v1522, %v1666
  %v1668 = vpop.f32.mrb[0].mxu0
  %v1669 = vpop.f32.mrb[0].mxu0
  %v1670 = vadd.f32 %v1525, %v1669
  %v1671 = vpop.f32.mrb[0].mxu0
  %1672 = vmatprep.mubr.bf16.mxu0 0
  %1673 = vmatmul.mubr.bf16.gmra.mrb[0].mxu0 %v1365
  %v1674 = vpop.f32.mrb[0].mxu0
  %v1675 = vadd.f32 %v1530, %v1674
  %v1676 = vpop.f32.mrb[0].mxu0
  %v1677 = vpop.f32.mrb[0].mxu0
  %v1678 = vadd.f32 %v1533, %v1677
  %v1679 = vpop.f32.mrb[0].mxu0
  %1680 = vmatprep.mubr.bf16.mxu0 0
  %1681 = vmatmul.mubr.bf16.gmra.mrb[0].mxu0 %v1366
  %v1682 = vpop.f32.mrb[0].mxu0
  %v1683 = vadd.f32 %v1538, %v1682
  %v1684 = vpop.f32.mrb[0].mxu0
  %v1685 = vpop.f32.mrb[0].mxu0
  %v1686 = vadd.f32 %v1541, %v1685
  %v1687 = vpop.f32.mrb[0].mxu0
  %1688 = vdwg.mxu0
  %v1689 = vld [vmem:[%s11] sm:$0x1]
  %v1691 = vlaneseq
  %v1692 = vshrl.u32 %v1691, 7
  %v1693 = vsub.s32 0, %v1692
  %v1694 = vrot.slane %v1689, %v1693
  %v1696 = vadd.f32 %v1627, %v1694
  %v1697 = vadd.f32 %v1630, %v1694
  %v1698 = vadd.f32 %v1635, %v1694
  %v1699 = vadd.f32 %v1638, %v1694
  %v1700 = vadd.f32 %v1643, %v1694
  %v1701 = vadd.f32 %v1646, %v1694
  %v1702 = vadd.f32 %v1651, %v1694
  %v1703 = vadd.f32 %v1654, %v1694
  %v1704 = vadd.f32 %v1659, %v1694
  %v1705 = vadd.f32 %v1662, %v1694
  %v1706 = vadd.f32 %v1667, %v1694
  %v1707 = vadd.f32 %v1670, %v1694
  %v1708 = vadd.f32 %v1675, %v1694
  %v1709 = vadd.f32 %v1678, %v1694
  %v1710 = vadd.f32 %v1683, %v1694
  %v1711 = vadd.f32 %v1686, %v1694
  %1712 = vst [vmem:[%s12] sm:$0xff] %v1696
  %1713 = vst [vmem:[%s12 + $0x8] sm:$0xff] %v1697
  %1714 = vst [vmem:[%s12 + $0x10] sm:$0xff] %v1698
  %1715 = vst [vmem:[%s12 + $0x18] sm:$0xff] %v1699
  %1716 = vst [vmem:[%s12 + $0x20] sm:$0xff] %v1700
  %1717 = vst [vmem:[%s12 + $0x28] sm:$0xff] %v1701
  %1718 = vst [vmem:[%s12 + $0x30] sm:$0xff] %v1702
  %1719 = vst [vmem:[%s12 + $0x38] sm:$0xff] %v1703
  %1720 = vst [vmem:[%s12 + $0x40] sm:$0xff] %v1704
  %1721 = vst [vmem:[%s12 + $0x48] sm:$0xff] %v1705
  %1722 = vst [vmem:[%s12 + $0x50] sm:$0xff] %v1706
  %1723 = vst [vmem:[%s12 + $0x58] sm:$0xff] %v1707
  %1724 = vst [vmem:[%s12 + $0x60] sm:$0xff] %v1708
  %1725 = vst [vmem:[%s12 + $0x68] sm:$0xff] %v1709
  %1726 = vst [vmem:[%s12 + $0x70] sm:$0xff] %v1710
  %1727 = vst [vmem:[%s12 + $0x78] sm:$0xff] %v1711
  // Predicated region
  $region50: #{sage_forward.1} parent=0 // pred_check
    _
  $region51: #{sage_forward.1} parent=0 // pred_check_branch
    %1729 = sbr.rel (0) target = $region53
  $region52: #{sage_forward.1} parent=0 // pred_region
    _
  $region53: #{sage_forward.1} parent=0 // pred_fallthru
    _
  // Predicated region
  $region54: #{sage_forward.1} parent=0 // pred_check
    _
  $region55: #{sage_forward.1} parent=0 // pred_check_branch
    %1731 = sbr.rel (0) target = $region57
  $region56: #{sage_forward.1} parent=0 // pred_region
    _
  $region57: #{sage_forward.1} parent=0 // pred_fallthru
    _

</llo_original>
